<compile_context>
chip_gen: v7x
topology: tpu7x:2x2x1
jax: 0.10.0
libtpu: 0.0.40
codegen_flags: <defaults>
</compile_context>

<pallas_src>
import jax
import jax.numpy as jnp
import numpy as np
from jax import lax
from jax.experimental import pallas as pl
from jax.experimental.pallas import tpu as pltpu


def _lstm_tagger_kernel(embp_ref,       # (S, 2E)  bf16 [embeds | reversed embeds]
                        win_ref,        # (2E, 8H) bf16 fused input weight
                        whh_ref,        # (2H, 8H) bf16 fused (block-structured) recurrent weight
                        b_ref,          # (1, 8H)  f32 fused biases (b_ih + b_hh, both dirs)
                        wtag_ref,       # (2H, Tp) f32 hidden2tag (padded)
                        btag_ref,       # (1, Tp)  f32 tag bias (padded cols = -1e9)
                        out_ref,        # (S, Tp)  f32 log-softmax scores (padded)
                        xg,             # scratch (S, 8H) f32 gate pre-activations
                        h_hist):        # scratch (S, 2H) f32 hidden history [fwd | bwd]
    S = embp_ref.shape[0]
    H = h_hist.shape[1] // 2

    # Fused input projection for both directions and all time steps (single
    # bf16 MXU pass over all S rows, N = 8H = 256 lanes). Biases folded in.
    xg[...] = jnp.dot(embp_ref[...], win_ref[...],
                      preferred_element_type=jnp.float32) + b_ref[...]

    # Hoist the recurrent weight (bf16 -> only 8 resident vregs; no spill risk
    # across the fully unrolled loop).
    whh = whh_ref[...]

    def body(t, carry):
        h_cat, c_cat = carry                      # (1, 2H), (1, 2H) f32 = [fwd | bwd]
        # One fused bf16 recurrent matmul for both directions (f32 accumulate).
        g = xg[pl.ds(t, 1), :] + jnp.dot(h_cat.astype(jnp.bfloat16), whh,
                                         preferred_element_type=jnp.float32)
        # Gate column order [i_f i_b | f_f f_b | o_f o_b | g_f g_b]:
        # sigmoid on one contiguous 6H slice, tanh only on the last 2H slice.
        sig = jax.nn.sigmoid(g[:, 0:6 * H])
        g_g = jnp.tanh(g[:, 6 * H:8 * H])         # [g_f | g_b]
        i_g = sig[:, 0:2 * H]                     # [i_f | i_b]
        f_g = sig[:, 2 * H:4 * H]                 # [f_f | f_b]
        o_g = sig[:, 4 * H:6 * H]                 # [o_f | o_b]
        c_new = f_g * c_cat + i_g * g_g
        h_new = o_g * jnp.tanh(c_new)             # (1, 2H) = [h_f | h_b]
        # Fused history: forward half at row t, backward half at row S-1-t.
        h_hist[pl.ds(t, 1), 0:H] = h_new[:, 0:H]
        h_hist[pl.ds(S - 1 - t, 1), H:2 * H] = h_new[:, H:2 * H]
        return h_new, c_new

    zeros2h = jnp.zeros((1, 2 * H), jnp.float32)
    lax.fori_loop(0, S, body, (zeros2h, zeros2h), unroll=True)

    # Single fused hidden2tag matmul + log_softmax over the padded 128-lane tag
    # axis. Padded bias columns are -1e9 -> exp() == 0, real columns unaffected.
    tag_space = jnp.dot(h_hist[...], wtag_ref[...],
                        preferred_element_type=jnp.float32) + btag_ref[...]
    m = jnp.max(tag_space, axis=1, keepdims=True)
    lse = m + jnp.log(jnp.sum(jnp.exp(tag_space - m), axis=1, keepdims=True))
    out_ref[...] = tag_space - lse


def _build_fused_weights(w_ih_f, w_hh_f, b_ih_f, b_hh_f,
                         w_ih_b, w_hh_b, b_ih_b, b_hh_b, H, E):
    """Fused column layout: [i_f i_b | f_f f_b | o_f o_b | g_f g_b], each H wide.

    W_in rows 0:E multiply embeds[t]; rows E:2E multiply embeds[S-1-t].
    W_hh rows 0:H multiply h_f;        rows H:2H multiply h_b.
    PyTorch nn.LSTM gate row-blocks are ordered [i, f, g, o].
    """
    gate_rows = (0, 1, 3, 2)                             # fused order i, f, o, g
    w_in = jnp.zeros((2 * E, 8 * H), jnp.float32)
    w_hh = jnp.zeros((2 * H, 8 * H), jnp.float32)
    b = jnp.zeros((1, 8 * H), jnp.float32)
    bf = b_ih_f + b_hh_f
    bb = b_ih_b + b_hh_b
    for k, p in enumerate(gate_rows):
        rf = slice(p * H, (p + 1) * H)                   # PyTorch gate rows
        cf = slice((2 * k) * H, (2 * k + 1) * H)         # fused fwd columns
        cb = slice((2 * k + 1) * H, (2 * k + 2) * H)     # fused bwd columns
        w_in = w_in.at[0:E, cf].set(w_ih_f[rf, :].T)
        w_in = w_in.at[E:2 * E, cb].set(w_ih_b[rf, :].T)
        w_hh = w_hh.at[0:H, cf].set(w_hh_f[rf, :].T)
        w_hh = w_hh.at[H:2 * H, cb].set(w_hh_b[rf, :].T)
        b = b.at[0, cf].set(bf[rf])
        b = b.at[0, cb].set(bb[rf])
    return w_in, w_hh, b


def prepare_fused_params(params):
    """One-time (per parameter set) weight fusion / padding / bf16 casts.

    Hoisted out of the per-call jitted path: the dozens of dynamic-update-slice
    ops emitted here would otherwise dominate a sub-microsecond kernel call.
    """
    (emb_table,
     w_ih_f, w_hh_f, b_ih_f, b_hh_f,
     w_ih_b, w_hh_b, b_ih_b, b_hh_b,
     w_tag, b_tag) = params
    E = emb_table.shape[1]
    H = w_hh_f.shape[1]                       # w_hh: (4H, H)
    T = w_tag.shape[0]                        # linear weight: (T, 2H)
    Tp = ((T + 127) // 128) * 128             # lane-dense padded tag dim

    w_in, w_hh, b_cat = _build_fused_weights(
        w_ih_f, w_hh_f, b_ih_f, b_hh_f,
        w_ih_b, w_hh_b, b_ih_b, b_hh_b, H, E)

    wtag = jnp.zeros((2 * H, Tp), jnp.float32).at[:, :T].set(w_tag.astype(jnp.float32).T)
    btag = jnp.full((1, Tp), -1e9, jnp.float32).at[0, :T].set(b_tag.astype(jnp.float32))

    fused = (emb_table.astype(jnp.bfloat16),          # bf16 MXU operand path
             w_in.astype(jnp.bfloat16),
             w_hh.astype(jnp.bfloat16),
             b_cat, wtag, btag)
    fused = jax.tree_util.tree_map(jax.block_until_ready, fused)
    return fused, T


@jax.jit
def _forward_padded(sentence, emb_bf16, w_in, w_hh, b_cat, wtag, btag):
    # Per-call glue: embedding gather (S, E), reversal, concat -> (S, 2E) bf16.
    embeds = emb_bf16[sentence]
    S = embeds.shape[0]
    H = w_hh.shape[0] // 2
    Tp = wtag.shape[1]
    emb_pair = jnp.concatenate([embeds, embeds[::-1]], axis=1)       # (S, 2E)

    vmem_spec = pl.BlockSpec(memory_space=pltpu.MemorySpace.VMEM)
    return pl.pallas_call(
        _lstm_tagger_kernel,
        out_shape=jax.ShapeDtypeStruct((S, Tp), jnp.float32),
        in_specs=[vmem_spec] * 6,
        out_specs=vmem_spec,
        scratch_shapes=[
            pltpu.VMEM((S, 8 * H), jnp.float32),   # fused gate pre-activations
            pltpu.VMEM((S, 2 * H), jnp.float32),   # fused hidden history [fwd|bwd]
        ],
    )(emb_pair, w_in, w_hh, b_cat, wtag, btag)


def lstm_tagger_forward(sentence, fused_params):
    fused, tagset_size = fused_params
    out_padded = _forward_padded(sentence, *fused)
    return out_padded[:, :tagset_size]


def _reference_forward(sentence, params):
    """Pure-JAX f32 reference matching torch nn.LSTM(bidirectional) + Linear + log_softmax."""
    (emb_table,
     w_ih_f, w_hh_f, b_ih_f, b_hh_f,
     w_ih_b, w_hh_b, b_ih_b, b_hh_b,
     w_tag, b_tag) = params
    embeds = emb_table[sentence].astype(jnp.float32)
    H = w_hh_f.shape[1]

    def run_dir(xs, w_ih, w_hh, b_ih, b_hh):
        def step(carry, x):
            h, c = carry
            g = x @ w_ih.T + b_ih + h @ w_hh.T + b_hh
            i = jax.nn.sigmoid(g[0:H])
            f = jax.nn.sigmoid(g[H:2 * H])
            gg = jnp.tanh(g[2 * H:3 * H])
            o = jax.nn.sigmoid(g[3 * H:4 * H])
            c = f * c + i * gg
            h = o * jnp.tanh(c)
            return (h, c), h
        init = (jnp.zeros((H,), jnp.float32), jnp.zeros((H,), jnp.float32))
        _, hs = lax.scan(step, init, xs)
        return hs

    h_fwd = run_dir(embeds, w_ih_f, w_hh_f, b_ih_f, b_hh_f)
    h_bwd = run_dir(embeds[::-1], w_ih_b, w_hh_b, b_ih_b, b_hh_b)[::-1]
    lstm_out = jnp.concatenate([h_fwd, h_bwd], axis=1)
    tag_space = lstm_out @ w_tag.T + b_tag
    return jax.nn.log_softmax(tag_space, axis=1)


def init_params(key, embedding_dim, hidden_dim, vocab_size, tagset_size):
    ks = jax.random.split(key, 11)
    s = 0.1
    return (
        jax.random.normal(ks[0], (vocab_size, embedding_dim), jnp.float32),          # embedding
        s * jax.random.normal(ks[1], (4 * hidden_dim, embedding_dim), jnp.float32),  # w_ih fwd
        s * jax.random.normal(ks[2], (4 * hidden_dim, hidden_dim), jnp.float32),     # w_hh fwd
        s * jax.random.normal(ks[3], (4 * hidden_dim,), jnp.float32),                # b_ih fwd
        s * jax.random.normal(ks[4], (4 * hidden_dim,), jnp.float32),                # b_hh fwd
        s * jax.random.normal(ks[5], (4 * hidden_dim, embedding_dim), jnp.float32),  # w_ih bwd
        s * jax.random.normal(ks[6], (4 * hidden_dim, hidden_dim), jnp.float32),     # w_hh bwd
        s * jax.random.normal(ks[7], (4 * hidden_dim,), jnp.float32),                # b_ih bwd
        s * jax.random.normal(ks[8], (4 * hidden_dim,), jnp.float32),                # b_hh bwd
        s * jax.random.normal(ks[9], (tagset_size, 2 * hidden_dim), jnp.float32),    # hidden2tag W
        s * jax.random.normal(ks[10], (tagset_size,), jnp.float32),                  # hidden2tag b
    )


if __name__ == "__main__":
    EMBEDDING_DIM = 16
    HIDDEN_DIM = 32
    VOCAB_SIZE = 20
    TAGSET_SIZE = 5
    SEQ_LEN = 8

    key = jax.random.PRNGKey(0)
    pkey, skey = jax.random.split(key)
    params = init_params(pkey, EMBEDDING_DIM, HIDDEN_DIM, VOCAB_SIZE, TAGSET_SIZE)
    sentence = jax.random.randint(skey, (SEQ_LEN,), 0, VOCAB_SIZE, dtype=jnp.int32)

    # One-time weight fusion (out of the per-call path), then the fused forward.
    fused_params = prepare_fused_params(params)
    tag_scores = lstm_tagger_forward(sentence, fused_params)
    tag_scores = jax.block_until_ready(tag_scores)

    ref = _reference_forward(sentence, params)
    assert tag_scores.shape == (SEQ_LEN, TAGSET_SIZE)
    assert np.allclose(np.asarray(tag_scores), np.asarray(ref), atol=5e-2, rtol=5e-2)

    print("KERNEL_OK")
</pallas_src>

<mosaic_0001>
module attributes {stable_mosaic.version = 11 : i64} {
  func.func @_lstm_tagger_kernel(%arg0: memref<8x32xbf16, #tpu.memory_space<vmem>>, %arg1: memref<32x256xbf16, #tpu.memory_space<vmem>>, %arg2: memref<64x256xbf16, #tpu.memory_space<vmem>>, %arg3: memref<1x256xf32, #tpu.memory_space<vmem>>, %arg4: memref<64x128xf32, #tpu.memory_space<vmem>>, %arg5: memref<1x128xf32, #tpu.memory_space<vmem>>, %arg6: memref<8x128xf32, #tpu.memory_space<vmem>>, %arg7: memref<8x256xf32, #tpu.memory_space<vmem>>, %arg8: memref<8x64xf32, #tpu.memory_space<vmem>>) attributes {dimension_semantics = [], scalar_prefetch = 0 : i64, scratch_operands = 2 : i64, tpu.core_type = #tpu.core_type<tc>} {
    %c0 = arith.constant 0 : index
    %c0_0 = arith.constant 0 : index
    %0 = vector.load %arg0[%c0, %c0_0] : memref<8x32xbf16, #tpu.memory_space<vmem>>, vector<8x32xbf16>
    %c0_1 = arith.constant 0 : index
    %c0_2 = arith.constant 0 : index
    %1 = vector.load %arg1[%c0_1, %c0_2] : memref<32x256xbf16, #tpu.memory_space<vmem>>, vector<32x256xbf16>
    %cst = arith.constant dense<0.000000e+00> : vector<8x256xf32>
    %2 = tpu.matmul %0, %1, %cst {dimension_numbers = #tpu.dot_dimension_numbers<[1], [0], [0], [1], [0, 0, 1, 1], [], []>} : vector<8x32xbf16>, vector<32x256xbf16>, vector<8x256xf32> -> vector<8x256xf32>
    %c0_3 = arith.constant 0 : index
    %c0_4 = arith.constant 0 : index
    %3 = vector.load %arg3[%c0_3, %c0_4] : memref<1x256xf32, #tpu.memory_space<vmem>>, vector<1x256xf32>
    %4 = vector.broadcast %3 : vector<1x256xf32> to vector<8x256xf32>
    %5 = arith.addf %2, %4 : vector<8x256xf32>
    %c0_5 = arith.constant 0 : index
    %c0_6 = arith.constant 0 : index
    %6 = vector.load %arg7[%c0_5, %c0_6] : memref<8x256xf32, #tpu.memory_space<vmem>>, vector<8x256xf32>
    tpu.vector_store %arg7[%c0_5, %c0_6], %5 {strides = array<i32>} : memref<8x256xf32, #tpu.memory_space<vmem>>, vector<8x256xf32>,
    %c0_7 = arith.constant 0 : index
    %c0_8 = arith.constant 0 : index
    %7 = vector.load %arg2[%c0_7, %c0_8] : memref<64x256xbf16, #tpu.memory_space<vmem>>, vector<64x256xbf16>
    %cst_9 = arith.constant 0.000000e+00 : f32
    %8 = vector.broadcast %cst_9 : f32 to vector<1x64xf32>
    %c0_i32 = arith.constant 0 : i32
    %9 = arith.index_cast %c0_i32 : i32 to index
    %c0_10 = arith.constant 0 : index
    %10 = vector.load %arg7[%9, %c0_10] : memref<8x256xf32, #tpu.memory_space<vmem>>, vector<1x256xf32>
    %11 = arith.truncf %8 : vector<1x64xf32> to vector<1x64xbf16>
    %cst_11 = arith.constant dense<0.000000e+00> : vector<1x256xf32>
    %12 = tpu.matmul %11, %7, %cst_11 {dimension_numbers = #tpu.dot_dimension_numbers<[1], [0], [0], [1], [0, 0, 1, 1], [], []>} : vector<1x64xbf16>, vector<64x256xbf16>, vector<1x256xf32> -> vector<1x256xf32>
    %13 = arith.addf %10, %12 : vector<1x256xf32>
    %14 = vector.extract_strided_slice %13 {offsets = [0, 0], sizes = [1, 192], strides = [1, 1]} : vector<1x256xf32> to vector<1x192xf32>
    %15 = arith.negf %14 : vector<1x192xf32>
    %16 = math.exp %15 : vector<1x192xf32>
    %cst_12 = arith.constant 1.000000e+00 : f32
    %17 = vector.broadcast %cst_12 : f32 to vector<1x192xf32>
    %18 = arith.addf %17, %16 : vector<1x192xf32>
    %19 = arith.divf %17, %18 : vector<1x192xf32>
    %20 = vector.extract_strided_slice %13 {offsets = [0, 192], sizes = [1, 64], strides = [1, 1]} : vector<1x256xf32> to vector<1x64xf32>
    %21 = math.tanh %20 : vector<1x64xf32>
    %22 = vector.extract_strided_slice %19 {offsets = [0, 0], sizes = [1, 64], strides = [1, 1]} : vector<1x192xf32> to vector<1x64xf32>
    %23 = vector.extract_strided_slice %19 {offsets = [0, 64], sizes = [1, 64], strides = [1, 1]} : vector<1x192xf32> to vector<1x64xf32>
    %24 = vector.extract_strided_slice %19 {offsets = [0, 128], sizes = [1, 64], strides = [1, 1]} : vector<1x192xf32> to vector<1x64xf32>
    %25 = arith.mulf %23, %8 : vector<1x64xf32>
    %26 = arith.mulf %22, %21 : vector<1x64xf32>
    %27 = arith.addf %25, %26 : vector<1x64xf32>
    %28 = math.tanh %27 : vector<1x64xf32>
    %29 = arith.mulf %24, %28 : vector<1x64xf32>
    %30 = vector.extract_strided_slice %29 {offsets = [0, 0], sizes = [1, 32], strides = [1, 1]} : vector<1x64xf32> to vector<1x32xf32>
    %31 = arith.index_cast %c0_i32 : i32 to index
    %c0_13 = arith.constant 0 : index
    %32 = vector.load %arg8[%31, %c0_13] : memref<8x64xf32, #tpu.memory_space<vmem>>, vector<1x32xf32>
    tpu.vector_store %arg8[%31, %c0_13], %30 {strides = array<i32>} : memref<8x64xf32, #tpu.memory_space<vmem>>, vector<1x32xf32>,
    %33 = vector.extract_strided_slice %29 {offsets = [0, 32], sizes = [1, 32], strides = [1, 1]} : vector<1x64xf32> to vector<1x32xf32>
    %c7_i32 = arith.constant 7 : i32
    %34 = arith.subi %c7_i32, %c0_i32 : i32
    %35 = arith.index_cast %34 : i32 to index
    %c32 = arith.constant 32 : index
    %36 = vector.load %arg8[%35, %c32] : memref<8x64xf32, #tpu.memory_space<vmem>>, vector<1x32xf32>
    tpu.vector_store %arg8[%35, %c32], %33 {strides = array<i32>} : memref<8x64xf32, #tpu.memory_space<vmem>>, vector<1x32xf32>,
    %c1_i32 = arith.constant 1 : i32
    %37 = arith.index_cast %c1_i32 : i32 to index
    %c0_14 = arith.constant 0 : index
    %38 = vector.load %arg7[%37, %c0_14] : memref<8x256xf32, #tpu.memory_space<vmem>>, vector<1x256xf32>
    %39 = arith.truncf %29 : vector<1x64xf32> to vector<1x64xbf16>
    %cst_15 = arith.constant dense<0.000000e+00> : vector<1x256xf32>
    %40 = tpu.matmul %39, %7, %cst_15 {dimension_numbers = #tpu.dot_dimension_numbers<[1], [0], [0], [1], [0, 0, 1, 1], [], []>} : vector<1x64xbf16>, vector<64x256xbf16>, vector<1x256xf32> -> vector<1x256xf32>
    %41 = arith.addf %38, %40 : vector<1x256xf32>
    %42 = vector.extract_strided_slice %41 {offsets = [0, 0], sizes = [1, 192], strides = [1, 1]} : vector<1x256xf32> to vector<1x192xf32>
    %43 = arith.negf %42 : vector<1x192xf32>
    %44 = math.exp %43 : vector<1x192xf32>
    %cst_16 = arith.constant 1.000000e+00 : f32
    %45 = vector.broadcast %cst_16 : f32 to vector<1x192xf32>
    %46 = arith.addf %45, %44 : vector<1x192xf32>
    %47 = arith.divf %45, %46 : vector<1x192xf32>
    %48 = vector.extract_strided_slice %41 {offsets = [0, 192], sizes = [1, 64], strides = [1, 1]} : vector<1x256xf32> to vector<1x64xf32>
    %49 = math.tanh %48 : vector<1x64xf32>
    %50 = vector.extract_strided_slice %47 {offsets = [0, 0], sizes = [1, 64], strides = [1, 1]} : vector<1x192xf32> to vector<1x64xf32>
    %51 = vector.extract_strided_slice %47 {offsets = [0, 64], sizes = [1, 64], strides = [1, 1]} : vector<1x192xf32> to vector<1x64xf32>
    %52 = vector.extract_strided_slice %47 {offsets = [0, 128], sizes = [1, 64], strides = [1, 1]} : vector<1x192xf32> to vector<1x64xf32>
    %53 = arith.mulf %51, %27 : vector<1x64xf32>
    %54 = arith.mulf %50, %49 : vector<1x64xf32>
    %55 = arith.addf %53, %54 : vector<1x64xf32>
    %56 = math.tanh %55 : vector<1x64xf32>
    %57 = arith.mulf %52, %56 : vector<1x64xf32>
    %58 = vector.extract_strided_slice %57 {offsets = [0, 0], sizes = [1, 32], strides = [1, 1]} : vector<1x64xf32> to vector<1x32xf32>
    %59 = arith.index_cast %c1_i32 : i32 to index
    %c0_17 = arith.constant 0 : index
    %60 = vector.load %arg8[%59, %c0_17] : memref<8x64xf32, #tpu.memory_space<vmem>>, vector<1x32xf32>
    tpu.vector_store %arg8[%59, %c0_17], %58 {strides = array<i32>} : memref<8x64xf32, #tpu.memory_space<vmem>>, vector<1x32xf32>,
    %61 = vector.extract_strided_slice %57 {offsets = [0, 32], sizes = [1, 32], strides = [1, 1]} : vector<1x64xf32> to vector<1x32xf32>
    %c7_i32_18 = arith.constant 7 : i32
    %62 = arith.subi %c7_i32_18, %c1_i32 : i32
    %63 = arith.index_cast %62 : i32 to index
    %c32_19 = arith.constant 32 : index
    %64 = vector.load %arg8[%63, %c32_19] : memref<8x64xf32, #tpu.memory_space<vmem>>, vector<1x32xf32>
    tpu.vector_store %arg8[%63, %c32_19], %61 {strides = array<i32>} : memref<8x64xf32, #tpu.memory_space<vmem>>, vector<1x32xf32>,
    %c2_i32 = arith.constant 2 : i32
    %65 = arith.index_cast %c2_i32 : i32 to index
    %c0_20 = arith.constant 0 : index
    %66 = vector.load %arg7[%65, %c0_20] : memref<8x256xf32, #tpu.memory_space<vmem>>, vector<1x256xf32>
    %67 = arith.truncf %57 : vector<1x64xf32> to vector<1x64xbf16>
    %cst_21 = arith.constant dense<0.000000e+00> : vector<1x256xf32>
    %68 = tpu.matmul %67, %7, %cst_21 {dimension_numbers = #tpu.dot_dimension_numbers<[1], [0], [0], [1], [0, 0, 1, 1], [], []>} : vector<1x64xbf16>, vector<64x256xbf16>, vector<1x256xf32> -> vector<1x256xf32>
    %69 = arith.addf %66, %68 : vector<1x256xf32>
    %70 = vector.extract_strided_slice %69 {offsets = [0, 0], sizes = [1, 192], strides = [1, 1]} : vector<1x256xf32> to vector<1x192xf32>
    %71 = arith.negf %70 : vector<1x192xf32>
    %72 = math.exp %71 : vector<1x192xf32>
    %cst_22 = arith.constant 1.000000e+00 : f32
    %73 = vector.broadcast %cst_22 : f32 to vector<1x192xf32>
    %74 = arith.addf %73, %72 : vector<1x192xf32>
    %75 = arith.divf %73, %74 : vector<1x192xf32>
    %76 = vector.extract_strided_slice %69 {offsets = [0, 192], sizes = [1, 64], strides = [1, 1]} : vector<1x256xf32> to vector<1x64xf32>
    %77 = math.tanh %76 : vector<1x64xf32>
    %78 = vector.extract_strided_slice %75 {offsets = [0, 0], sizes = [1, 64], strides = [1, 1]} : vector<1x192xf32> to vector<1x64xf32>
    %79 = vector.extract_strided_slice %75 {offsets = [0, 64], sizes = [1, 64], strides = [1, 1]} : vector<1x192xf32> to vector<1x64xf32>
    %80 = vector.extract_strided_slice %75 {offsets = [0, 128], sizes = [1, 64], strides = [1, 1]} : vector<1x192xf32> to vector<1x64xf32>
    %81 = arith.mulf %79, %55 : vector<1x64xf32>
    %82 = arith.mulf %78, %77 : vector<1x64xf32>
    %83 = arith.addf %81, %82 : vector<1x64xf32>
    %84 = math.tanh %83 : vector<1x64xf32>
    %85 = arith.mulf %80, %84 : vector<1x64xf32>
    %86 = vector.extract_strided_slice %85 {offsets = [0, 0], sizes = [1, 32], strides = [1, 1]} : vector<1x64xf32> to vector<1x32xf32>
    %87 = arith.index_cast %c2_i32 : i32 to index
    %c0_23 = arith.constant 0 : index
    %88 = vector.load %arg8[%87, %c0_23] : memref<8x64xf32, #tpu.memory_space<vmem>>, vector<1x32xf32>
    tpu.vector_store %arg8[%87, %c0_23], %86 {strides = array<i32>} : memref<8x64xf32, #tpu.memory_space<vmem>>, vector<1x32xf32>,
    %89 = vector.extract_strided_slice %85 {offsets = [0, 32], sizes = [1, 32], strides = [1, 1]} : vector<1x64xf32> to vector<1x32xf32>
    %c7_i32_24 = arith.constant 7 : i32
    %90 = arith.subi %c7_i32_24, %c2_i32 : i32
    %91 = arith.index_cast %90 : i32 to index
    %c32_25 = arith.constant 32 : index
    %92 = vector.load %arg8[%91, %c32_25] : memref<8x64xf32, #tpu.memory_space<vmem>>, vector<1x32xf32>
    tpu.vector_store %arg8[%91, %c32_25], %89 {strides = array<i32>} : memref<8x64xf32, #tpu.memory_space<vmem>>, vector<1x32xf32>,
    %c3_i32 = arith.constant 3 : i32
    %93 = arith.index_cast %c3_i32 : i32 to index
    %c0_26 = arith.constant 0 : index
    %94 = vector.load %arg7[%93, %c0_26] : memref<8x256xf32, #tpu.memory_space<vmem>>, vector<1x256xf32>
    %95 = arith.truncf %85 : vector<1x64xf32> to vector<1x64xbf16>
    %cst_27 = arith.constant dense<0.000000e+00> : vector<1x256xf32>
    %96 = tpu.matmul %95, %7, %cst_27 {dimension_numbers = #tpu.dot_dimension_numbers<[1], [0], [0], [1], [0, 0, 1, 1], [], []>} : vector<1x64xbf16>, vector<64x256xbf16>, vector<1x256xf32> -> vector<1x256xf32>
    %97 = arith.addf %94, %96 : vector<1x256xf32>
    %98 = vector.extract_strided_slice %97 {offsets = [0, 0], sizes = [1, 192], strides = [1, 1]} : vector<1x256xf32> to vector<1x192xf32>
    %99 = arith.negf %98 : vector<1x192xf32>
    %100 = math.exp %99 : vector<1x192xf32>
    %cst_28 = arith.constant 1.000000e+00 : f32
    %101 = vector.broadcast %cst_28 : f32 to vector<1x192xf32>
    %102 = arith.addf %101, %100 : vector<1x192xf32>
    %103 = arith.divf %101, %102 : vector<1x192xf32>
    %104 = vector.extract_strided_slice %97 {offsets = [0, 192], sizes = [1, 64], strides = [1, 1]} : vector<1x256xf32> to vector<1x64xf32>
    %105 = math.tanh %104 : vector<1x64xf32>
    %106 = vector.extract_strided_slice %103 {offsets = [0, 0], sizes = [1, 64], strides = [1, 1]} : vector<1x192xf32> to vector<1x64xf32>
    %107 = vector.extract_strided_slice %103 {offsets = [0, 64], sizes = [1, 64], strides = [1, 1]} : vector<1x192xf32> to vector<1x64xf32>
    %108 = vector.extract_strided_slice %103 {offsets = [0, 128], sizes = [1, 64], strides = [1, 1]} : vector<1x192xf32> to vector<1x64xf32>
    %109 = arith.mulf %107, %83 : vector<1x64xf32>
    %110 = arith.mulf %106, %105 : vector<1x64xf32>
    %111 = arith.addf %109, %110 : vector<1x64xf32>
    %112 = math.tanh %111 : vector<1x64xf32>
    %113 = arith.mulf %108, %112 : vector<1x64xf32>
    %114 = vector.extract_strided_slice %113 {offsets = [0, 0], sizes = [1, 32], strides = [1, 1]} : vector<1x64xf32> to vector<1x32xf32>
    %115 = arith.index_cast %c3_i32 : i32 to index
    %c0_29 = arith.constant 0 : index
    %116 = vector.load %arg8[%115, %c0_29] : memref<8x64xf32, #tpu.memory_space<vmem>>, vector<1x32xf32>
    tpu.vector_store %arg8[%115, %c0_29], %114 {strides = array<i32>} : memref<8x64xf32, #tpu.memory_space<vmem>>, vector<1x32xf32>,
    %117 = vector.extract_strided_slice %113 {offsets = [0, 32], sizes = [1, 32], strides = [1, 1]} : vector<1x64xf32> to vector<1x32xf32>
    %c7_i32_30 = arith.constant 7 : i32
    %118 = arith.subi %c7_i32_30, %c3_i32 : i32
    %119 = arith.index_cast %118 : i32 to index
    %c32_31 = arith.constant 32 : index
    %120 = vector.load %arg8[%119, %c32_31] : memref<8x64xf32, #tpu.memory_space<vmem>>, vector<1x32xf32>
    tpu.vector_store %arg8[%119, %c32_31], %117 {strides = array<i32>} : memref<8x64xf32, #tpu.memory_space<vmem>>, vector<1x32xf32>,
    %c4_i32 = arith.constant 4 : i32
    %121 = arith.index_cast %c4_i32 : i32 to index
    %c0_32 = arith.constant 0 : index
    %122 = vector.load %arg7[%121, %c0_32] : memref<8x256xf32, #tpu.memory_space<vmem>>, vector<1x256xf32>
    %123 = arith.truncf %113 : vector<1x64xf32> to vector<1x64xbf16>
    %cst_33 = arith.constant dense<0.000000e+00> : vector<1x256xf32>
    %124 = tpu.matmul %123, %7, %cst_33 {dimension_numbers = #tpu.dot_dimension_numbers<[1], [0], [0], [1], [0, 0, 1, 1], [], []>} : vector<1x64xbf16>, vector<64x256xbf16>, vector<1x256xf32> -> vector<1x256xf32>
    %125 = arith.addf %122, %124 : vector<1x256xf32>
    %126 = vector.extract_strided_slice %125 {offsets = [0, 0], sizes = [1, 192], strides = [1, 1]} : vector<1x256xf32> to vector<1x192xf32>
    %127 = arith.negf %126 : vector<1x192xf32>
    %128 = math.exp %127 : vector<1x192xf32>
    %cst_34 = arith.constant 1.000000e+00 : f32
    %129 = vector.broadcast %cst_34 : f32 to vector<1x192xf32>
    %130 = arith.addf %129, %128 : vector<1x192xf32>
    %131 = arith.divf %129, %130 : vector<1x192xf32>
    %132 = vector.extract_strided_slice %125 {offsets = [0, 192], sizes = [1, 64], strides = [1, 1]} : vector<1x256xf32> to vector<1x64xf32>
    %133 = math.tanh %132 : vector<1x64xf32>
    %134 = vector.extract_strided_slice %131 {offsets = [0, 0], sizes = [1, 64], strides = [1, 1]} : vector<1x192xf32> to vector<1x64xf32>
    %135 = vector.extract_strided_slice %131 {offsets = [0, 64], sizes = [1, 64], strides = [1, 1]} : vector<1x192xf32> to vector<1x64xf32>
    %136 = vector.extract_strided_slice %131 {offsets = [0, 128], sizes = [1, 64], strides = [1, 1]} : vector<1x192xf32> to vector<1x64xf32>
    %137 = arith.mulf %135, %111 : vector<1x64xf32>
    %138 = arith.mulf %134, %133 : vector<1x64xf32>
    %139 = arith.addf %137, %138 : vector<1x64xf32>
    %140 = math.tanh %139 : vector<1x64xf32>
    %141 = arith.mulf %136, %140 : vector<1x64xf32>
    %142 = vector.extract_strided_slice %141 {offsets = [0, 0], sizes = [1, 32], strides = [1, 1]} : vector<1x64xf32> to vector<1x32xf32>
    %143 = arith.index_cast %c4_i32 : i32 to index
    %c0_35 = arith.constant 0 : index
    %144 = vector.load %arg8[%143, %c0_35] : memref<8x64xf32, #tpu.memory_space<vmem>>, vector<1x32xf32>
    tpu.vector_store %arg8[%143, %c0_35], %142 {strides = array<i32>} : memref<8x64xf32, #tpu.memory_space<vmem>>, vector<1x32xf32>,
    %145 = vector.extract_strided_slice %141 {offsets = [0, 32], sizes = [1, 32], strides = [1, 1]} : vector<1x64xf32> to vector<1x32xf32>
    %c7_i32_36 = arith.constant 7 : i32
    %146 = arith.subi %c7_i32_36, %c4_i32 : i32
    %147 = arith.index_cast %146 : i32 to index
    %c32_37 = arith.constant 32 : index
    %148 = vector.load %arg8[%147, %c32_37] : memref<8x64xf32, #tpu.memory_space<vmem>>, vector<1x32xf32>
    tpu.vector_store %arg8[%147, %c32_37], %145 {strides = array<i32>} : memref<8x64xf32, #tpu.memory_space<vmem>>, vector<1x32xf32>,
    %c5_i32 = arith.constant 5 : i32
    %149 = arith.index_cast %c5_i32 : i32 to index
    %c0_38 = arith.constant 0 : index
    %150 = vector.load %arg7[%149, %c0_38] : memref<8x256xf32, #tpu.memory_space<vmem>>, vector<1x256xf32>
    %151 = arith.truncf %141 : vector<1x64xf32> to vector<1x64xbf16>
    %cst_39 = arith.constant dense<0.000000e+00> : vector<1x256xf32>
    %152 = tpu.matmul %151, %7, %cst_39 {dimension_numbers = #tpu.dot_dimension_numbers<[1], [0], [0], [1], [0, 0, 1, 1], [], []>} : vector<1x64xbf16>, vector<64x256xbf16>, vector<1x256xf32> -> vector<1x256xf32>
    %153 = arith.addf %150, %152 : vector<1x256xf32>
    %154 = vector.extract_strided_slice %153 {offsets = [0, 0], sizes = [1, 192], strides = [1, 1]} : vector<1x256xf32> to vector<1x192xf32>
    %155 = arith.negf %154 : vector<1x192xf32>
    %156 = math.exp %155 : vector<1x192xf32>
    %cst_40 = arith.constant 1.000000e+00 : f32
    %157 = vector.broadcast %cst_40 : f32 to vector<1x192xf32>
    %158 = arith.addf %157, %156 : vector<1x192xf32>
    %159 = arith.divf %157, %158 : vector<1x192xf32>
    %160 = vector.extract_strided_slice %153 {offsets = [0, 192], sizes = [1, 64], strides = [1, 1]} : vector<1x256xf32> to vector<1x64xf32>
    %161 = math.tanh %160 : vector<1x64xf32>
    %162 = vector.extract_strided_slice %159 {offsets = [0, 0], sizes = [1, 64], strides = [1, 1]} : vector<1x192xf32> to vector<1x64xf32>
    %163 = vector.extract_strided_slice %159 {offsets = [0, 64], sizes = [1, 64], strides = [1, 1]} : vector<1x192xf32> to vector<1x64xf32>
    %164 = vector.extract_strided_slice %159 {offsets = [0, 128], sizes = [1, 64], strides = [1, 1]} : vector<1x192xf32> to vector<1x64xf32>
    %165 = arith.mulf %163, %139 : vector<1x64xf32>
    %166 = arith.mulf %162, %161 : vector<1x64xf32>
    %167 = arith.addf %165, %166 : vector<1x64xf32>
    %168 = math.tanh %167 : vector<1x64xf32>
    %169 = arith.mulf %164, %168 : vector<1x64xf32>
    %170 = vector.extract_strided_slice %169 {offsets = [0, 0], sizes = [1, 32], strides = [1, 1]} : vector<1x64xf32> to vector<1x32xf32>
    %171 = arith.index_cast %c5_i32 : i32 to index
    %c0_41 = arith.constant 0 : index
    %172 = vector.load %arg8[%171, %c0_41] : memref<8x64xf32, #tpu.memory_space<vmem>>, vector<1x32xf32>
    tpu.vector_store %arg8[%171, %c0_41], %170 {strides = array<i32>} : memref<8x64xf32, #tpu.memory_space<vmem>>, vector<1x32xf32>,
    %173 = vector.extract_strided_slice %169 {offsets = [0, 32], sizes = [1, 32], strides = [1, 1]} : vector<1x64xf32> to vector<1x32xf32>
    %c7_i32_42 = arith.constant 7 : i32
    %174 = arith.subi %c7_i32_42, %c5_i32 : i32
    %175 = arith.index_cast %174 : i32 to index
    %c32_43 = arith.constant 32 : index
    %176 = vector.load %arg8[%175, %c32_43] : memref<8x64xf32, #tpu.memory_space<vmem>>, vector<1x32xf32>
    tpu.vector_store %arg8[%175, %c32_43], %173 {strides = array<i32>} : memref<8x64xf32, #tpu.memory_space<vmem>>, vector<1x32xf32>,
    %c6_i32 = arith.constant 6 : i32
    %177 = arith.index_cast %c6_i32 : i32 to index
    %c0_44 = arith.constant 0 : index
    %178 = vector.load %arg7[%177, %c0_44] : memref<8x256xf32, #tpu.memory_space<vmem>>, vector<1x256xf32>
    %179 = arith.truncf %169 : vector<1x64xf32> to vector<1x64xbf16>
    %cst_45 = arith.constant dense<0.000000e+00> : vector<1x256xf32>
    %180 = tpu.matmul %179, %7, %cst_45 {dimension_numbers = #tpu.dot_dimension_numbers<[1], [0], [0], [1], [0, 0, 1, 1], [], []>} : vector<1x64xbf16>, vector<64x256xbf16>, vector<1x256xf32> -> vector<1x256xf32>
    %181 = arith.addf %178, %180 : vector<1x256xf32>
    %182 = vector.extract_strided_slice %181 {offsets = [0, 0], sizes = [1, 192], strides = [1, 1]} : vector<1x256xf32> to vector<1x192xf32>
    %183 = arith.negf %182 : vector<1x192xf32>
    %184 = math.exp %183 : vector<1x192xf32>
    %cst_46 = arith.constant 1.000000e+00 : f32
    %185 = vector.broadcast %cst_46 : f32 to vector<1x192xf32>
    %186 = arith.addf %185, %184 : vector<1x192xf32>
    %187 = arith.divf %185, %186 : vector<1x192xf32>
    %188 = vector.extract_strided_slice %181 {offsets = [0, 192], sizes = [1, 64], strides = [1, 1]} : vector<1x256xf32> to vector<1x64xf32>
    %189 = math.tanh %188 : vector<1x64xf32>
    %190 = vector.extract_strided_slice %187 {offsets = [0, 0], sizes = [1, 64], strides = [1, 1]} : vector<1x192xf32> to vector<1x64xf32>
    %191 = vector.extract_strided_slice %187 {offsets = [0, 64], sizes = [1, 64], strides = [1, 1]} : vector<1x192xf32> to vector<1x64xf32>
    %192 = vector.extract_strided_slice %187 {offsets = [0, 128], sizes = [1, 64], strides = [1, 1]} : vector<1x192xf32> to vector<1x64xf32>
    %193 = arith.mulf %191, %167 : vector<1x64xf32>
    %194 = arith.mulf %190, %189 : vector<1x64xf32>
    %195 = arith.addf %193, %194 : vector<1x64xf32>
    %196 = math.tanh %195 : vector<1x64xf32>
    %197 = arith.mulf %192, %196 : vector<1x64xf32>
    %198 = vector.extract_strided_slice %197 {offsets = [0, 0], sizes = [1, 32], strides = [1, 1]} : vector<1x64xf32> to vector<1x32xf32>
    %199 = arith.index_cast %c6_i32 : i32 to index
    %c0_47 = arith.constant 0 : index
    %200 = vector.load %arg8[%199, %c0_47] : memref<8x64xf32, #tpu.memory_space<vmem>>, vector<1x32xf32>
    tpu.vector_store %arg8[%199, %c0_47], %198 {strides = array<i32>} : memref<8x64xf32, #tpu.memory_space<vmem>>, vector<1x32xf32>,
    %201 = vector.extract_strided_slice %197 {offsets = [0, 32], sizes = [1, 32], strides = [1, 1]} : vector<1x64xf32> to vector<1x32xf32>
    %c7_i32_48 = arith.constant 7 : i32
    %202 = arith.subi %c7_i32_48, %c6_i32 : i32
    %203 = arith.index_cast %202 : i32 to index
    %c32_49 = arith.constant 32 : index
    %204 = vector.load %arg8[%203, %c32_49] : memref<8x64xf32, #tpu.memory_space<vmem>>, vector<1x32xf32>
    tpu.vector_store %arg8[%203, %c32_49], %201 {strides = array<i32>} : memref<8x64xf32, #tpu.memory_space<vmem>>, vector<1x32xf32>,
    %c7_i32_50 = arith.constant 7 : i32
    %205 = arith.index_cast %c7_i32_50 : i32 to index
    %c0_51 = arith.constant 0 : index
    %206 = vector.load %arg7[%205, %c0_51] : memref<8x256xf32, #tpu.memory_space<vmem>>, vector<1x256xf32>
    %207 = arith.truncf %197 : vector<1x64xf32> to vector<1x64xbf16>
    %cst_52 = arith.constant dense<0.000000e+00> : vector<1x256xf32>
    %208 = tpu.matmul %207, %7, %cst_52 {dimension_numbers = #tpu.dot_dimension_numbers<[1], [0], [0], [1], [0, 0, 1, 1], [], []>} : vector<1x64xbf16>, vector<64x256xbf16>, vector<1x256xf32> -> vector<1x256xf32>
    %209 = arith.addf %206, %208 : vector<1x256xf32>
    %210 = vector.extract_strided_slice %209 {offsets = [0, 0], sizes = [1, 192], strides = [1, 1]} : vector<1x256xf32> to vector<1x192xf32>
    %211 = arith.negf %210 : vector<1x192xf32>
    %212 = math.exp %211 : vector<1x192xf32>
    %cst_53 = arith.constant 1.000000e+00 : f32
    %213 = vector.broadcast %cst_53 : f32 to vector<1x192xf32>
    %214 = arith.addf %213, %212 : vector<1x192xf32>
    %215 = arith.divf %213, %214 : vector<1x192xf32>
    %216 = vector.extract_strided_slice %209 {offsets = [0, 192], sizes = [1, 64], strides = [1, 1]} : vector<1x256xf32> to vector<1x64xf32>
    %217 = math.tanh %216 : vector<1x64xf32>
    %218 = vector.extract_strided_slice %215 {offsets = [0, 0], sizes = [1, 64], strides = [1, 1]} : vector<1x192xf32> to vector<1x64xf32>
    %219 = vector.extract_strided_slice %215 {offsets = [0, 64], sizes = [1, 64], strides = [1, 1]} : vector<1x192xf32> to vector<1x64xf32>
    %220 = vector.extract_strided_slice %215 {offsets = [0, 128], sizes = [1, 64], strides = [1, 1]} : vector<1x192xf32> to vector<1x64xf32>
    %221 = arith.mulf %219, %195 : vector<1x64xf32>
    %222 = arith.mulf %218, %217 : vector<1x64xf32>
    %223 = arith.addf %221, %222 : vector<1x64xf32>
    %224 = math.tanh %223 : vector<1x64xf32>
    %225 = arith.mulf %220, %224 : vector<1x64xf32>
    %226 = vector.extract_strided_slice %225 {offsets = [0, 0], sizes = [1, 32], strides = [1, 1]} : vector<1x64xf32> to vector<1x32xf32>
    %227 = arith.index_cast %c7_i32_50 : i32 to index
    %c0_54 = arith.constant 0 : index
    %228 = vector.load %arg8[%227, %c0_54] : memref<8x64xf32, #tpu.memory_space<vmem>>, vector<1x32xf32>
    tpu.vector_store %arg8[%227, %c0_54], %226 {strides = array<i32>} : memref<8x64xf32, #tpu.memory_space<vmem>>, vector<1x32xf32>,
    %229 = vector.extract_strided_slice %225 {offsets = [0, 32], sizes = [1, 32], strides = [1, 1]} : vector<1x64xf32> to vector<1x32xf32>
    %c7_i32_55 = arith.constant 7 : i32
    %230 = arith.subi %c7_i32_55, %c7_i32_50 : i32
    %231 = arith.index_cast %230 : i32 to index
    %c32_56 = arith.constant 32 : index
    %232 = vector.load %arg8[%231, %c32_56] : memref<8x64xf32, #tpu.memory_space<vmem>>, vector<1x32xf32>
    tpu.vector_store %arg8[%231, %c32_56], %229 {strides = array<i32>} : memref<8x64xf32, #tpu.memory_space<vmem>>, vector<1x32xf32>,
    %c8_i32 = arith.constant 8 : i32
    %c0_57 = arith.constant 0 : index
    %c0_58 = arith.constant 0 : index
    %233 = vector.load %arg8[%c0_57, %c0_58] : memref<8x64xf32, #tpu.memory_space<vmem>>, vector<8x64xf32>
    %c0_59 = arith.constant 0 : index
    %c0_60 = arith.constant 0 : index
    %234 = vector.load %arg4[%c0_59, %c0_60] : memref<64x128xf32, #tpu.memory_space<vmem>>, vector<64x128xf32>
    %cst_61 = arith.constant dense<0.000000e+00> : vector<8x128xf32>
    %235 = tpu.matmul %233, %234, %cst_61 {dimension_numbers = #tpu.dot_dimension_numbers<[1], [0], [0], [1], [0, 0, 1, 1], [], []>} : vector<8x64xf32>, vector<64x128xf32>, vector<8x128xf32> -> vector<8x128xf32>
    %c0_62 = arith.constant 0 : index
    %c0_63 = arith.constant 0 : index
    %236 = vector.load %arg5[%c0_62, %c0_63] : memref<1x128xf32, #tpu.memory_space<vmem>>, vector<1x128xf32>
    %237 = vector.broadcast %236 : vector<1x128xf32> to vector<8x128xf32>
    %238 = arith.addf %235, %237 : vector<8x128xf32>
    %cst_64 = arith.constant dense<0xFF800000> : vector<8xf32>
    %239 = vector.multi_reduction <maximumf>, %238, %cst_64 [1] : vector<8x128xf32> to vector<8xf32>
    %240 = vector.shape_cast %239 : vector<8xf32> to vector<8x1xf32>
    %241 = vector.broadcast %240 : vector<8x1xf32> to vector<8x128xf32>
    %242 = arith.subf %238, %241 : vector<8x128xf32>
    %243 = math.exp %242 : vector<8x128xf32>
    %cst_65 = arith.constant dense<0.000000e+00> : vector<8xf32>
    %244 = vector.multi_reduction <add>, %243, %cst_65 [1] : vector<8x128xf32> to vector<8xf32>
    %245 = vector.shape_cast %244 : vector<8xf32> to vector<8x1xf32>
    %246 = math.log %245 : vector<8x1xf32>
    %247 = arith.addf %240, %246 : vector<8x1xf32>
    %248 = vector.broadcast %247 : vector<8x1xf32> to vector<8x128xf32>
    %249 = arith.subf %238, %248 : vector<8x128xf32>
    %c0_66 = arith.constant 0 : index
    %c0_67 = arith.constant 0 : index
    %250 = vector.load %arg6[%c0_66, %c0_67] : memref<8x128xf32, #tpu.memory_space<vmem>>, vector<8x128xf32>
    tpu.vector_store %arg6[%c0_66, %c0_67], %249 {strides = array<i32>} : memref<8x128xf32, #tpu.memory_space<vmem>>, vector<8x128xf32>,
    return
  }
}

</mosaic_0001>

<llo_original>
// kernel: _forward_padded.1
$region0: #{_forward_padded.1}
  #allocation0 [shape = 'u32[]', space=smem, size = 0x4, offset = 0x4, fixed_abs, tag = 'smem constant byte address 0x4 - core index']
  #allocation1 [shape = 'u32[144,128]{1,0:T(1,128)}', space=vmem, size = 0x12000, scoped, tag = 'internal scratch']
  #allocation2 [shape = 'f32[8,256]{1,0:T(8,128)}', space=vmem, size = 0x2000, scoped, tag = 'scratch operand']
  #allocation3 [shape = 'f32[8,64]{1,0:T(8,128)}', space=vmem, size = 0x1000, scoped, tag = 'scratch operand']
  %s0 = inlined_call_operand.vmem [shape: bf16[8,32], index: 0, kind: input, shape index: {}]
  %s1 = inlined_call_operand.vmem [shape: bf16[32,256], index: 1, kind: input, shape index: {}]
  %s2 = inlined_call_operand.vmem [shape: bf16[64,256], index: 2, kind: input, shape index: {}]
  %s3 = inlined_call_operand.vmem [shape: f32[1,256], index: 3, kind: input, shape index: {}]
  %s4 = inlined_call_operand.hbm [shape: f32[64,128], index: 4, kind: input, shape index: {}]
  %s5 = inlined_call_operand.vmem [shape: f32[1,128], index: 5, kind: input, shape index: {}]
  %s6 = inlined_call_operand.hbm [shape: f32[8,128], index: 6, kind: output, shape index: {}]
  %s7 = sld [smem:[#allocation0]]
  $region38: #{_forward_padded.1} parent=0
    _
  %s9 = ssub.s32 1, %s7
  %s10 = scalar_select 0, %s9, %s7
  $region1: #{_forward_padded.1} parent=0
    #allocation4 [shape = 'u8[32768]{0}', space=vmem, size = 0x8000, scoped, tag = 'input window, operand 4, single buffered']
    #allocation5 [shape = 's32[1]{0}', space=sflag, size = 0x4, scoped, tag = 'scoped memory for _forward_padded.1']
    #allocation6 [shape = 's32[1]{0}', space=sflag, size = 0x4, scoped, tag = 'scoped memory for _forward_padded.1']
    #allocation7 [shape = 'u8[4096]{0}', space=vmem, size = 0x1000, scoped, tag = 'output window, operand 0, single buffered']
    %11 = vsyncpa [#allocation5], 0
    %12 = vsyncpa [#allocation6], 0
    // Predicated region
    $region2: #{_forward_padded.1} parent=1 // pred_check
      _
    $region3: #{_forward_padded.1} parent=1 // pred_check_branch
      %14 = sbr.rel (0) target = $region5
    $region4: #{_forward_padded.1} parent=1 // pred_region
      _
    $region5: #{_forward_padded.1} parent=1 // pred_fallthru
      _
    // Predicated region
    $region6: #{_forward_padded.1} parent=1 // pred_check
      _
    $region7: #{_forward_padded.1} parent=1 // pred_check_branch
      %16 = sbr.rel (0) target = $region9
    $region8: #{_forward_padded.1} parent=1 // pred_region
      _
    $region9: #{_forward_padded.1} parent=1 // pred_fallthru
      _
    // Predicated region
    $region10: #{_forward_padded.1} parent=1 // pred_check
      _
    $region11: #{_forward_padded.1} parent=1 // pred_check_branch
      %18 = sbr.rel (0) target = $region13
    $region12: #{_forward_padded.1} parent=1 // pred_region
      _
    $region13: #{_forward_padded.1} parent=1 // pred_fallthru
      _
    // Predicated region
    $region14: #{_forward_padded.1} parent=1 // pred_check
      _
    $region15: #{_forward_padded.1} parent=1 // pred_check_branch
      %20 = sbr.rel (0) target = $region17
    $region16: #{_forward_padded.1} parent=1 // pred_region
      _
    $region17: #{_forward_padded.1} parent=1 // pred_fallthru
      _
    // Predicated region
    $region18: #{_forward_padded.1} parent=1 // pred_check
      _
    $region19: #{_forward_padded.1} parent=1 // pred_check_branch
      %22 = sbr.rel (0) target = $region21
    $region20: #{_forward_padded.1} parent=1 // pred_region
      %s24 = ssub.s32 1024, 1024
      %25 = vsyncadd [#allocation5], %s24
      %s26 = sshll.u32 [#allocation4], 4
      %s27 = int_to_ptr.vmem [resolvable:$true] %s26
      %32 = dma.hbm_to_vmem [thread:$0]  %s4, 1024, %s27, [#allocation5], 128, 128, 8
    $region21: #{_forward_padded.1} parent=1 // pred_fallthru
      _
    // Predicated region
    $region22: #{_forward_padded.1} parent=1 // pred_check
      _
    $region23: #{_forward_padded.1} parent=1 // pred_check_branch
      %34 = sbr.rel (0) target = $region25
    $region24: #{_forward_padded.1} parent=1 // pred_region
      _
    $region25: #{_forward_padded.1} parent=1 // pred_fallthru
      _
    // Predicated region
    $region26: #{_forward_padded.1} parent=1 // pred_check
      _
    $region27: #{_forward_padded.1} parent=1 // pred_check_branch
      %36 = sbr.rel (0) target = $region29
    $region28: #{_forward_padded.1} parent=1 // pred_region
      %37 = dma.done [#allocation5], 1024
    $region29: #{_forward_padded.1} parent=1 // pred_fallthru
      _
    %v39 = vld [vmem:[%s0] sm:$0xf]
    %v40 = vld [vmem:[%s1] sm:$0xff]
    %v41 = vld [vmem:[%s1 + $0x8] sm:$0xff]
    %v42 = vld [vmem:[%s1 + $0x10] sm:$0xff]
    %v43 = vld [vmem:[%s1 + $0x18] sm:$0xff]
    %v44 = vld [vmem:[%s3] sm:$0x3]
    %v46 = vlaneseq
    %v47 = vshrl.u32 %v46, 7
    %v48 = vsub.s32 0, %v47
    %v49 = vrot.slane %v44, %v48
    %v50 = vlaneseq
    %v51 = vshrl.u32 %v50, 7
    %v52 = vsub.s32 1, %v51
    %v53 = vrot.slane %v44, %v52
    %v60 = vunpack.c.l.b16 %v40
    %v61 = vunpack.c.h.b16 %v40
    %v62 = vunpack.c.l.b16 %v41
    %v63 = vunpack.c.h.b16 %v41
    %v64 = vunpack.c.l.b16 %v42
    %v65 = vunpack.c.h.b16 %v42
    %v66 = vunpack.c.l.b16 %v43
    %v67 = vunpack.c.h.b16 %v43
    %v68 = vpack.c.b16 %v62, %v60
    %v69 = vpack.c.b16 %v63, %v61
    %v70 = vpack.c.b16 %v66, %v64
    %v71 = vpack.c.b16 %v67, %v65
    %vm76 = vcmask 261120
    %v78 = vsel %vm76, %v39, 0
    %80 = vmatprep.subr.bf16.mxu0 %v69
    %81 = vmatpush1.bf16.msra.mxu0 %v68
    %82 = vmatprep.subr.bf16.mxu0 %v71
    %83 = vmatpush1.bf16.msra.mxu0 %v70
    %84 = vmatprep.subr.bf16.mxu0 0
    %85 = vmatpush1.bf16.msra.mxu0 0
    %86 = vmatprep.subr.bf16.mxu0 0
    %87 = vmatpush1.bf16.msra.mxu0 0
    %88 = vmatprep.subr.bf16.mxu0 0
    %89 = vmatpush1.bf16.msra.mxu0 0
    %90 = vmatprep.subr.bf16.mxu0 0
    %91 = vmatpush1.bf16.msra.mxu0 0
    %92 = vmatprep.subr.bf16.mxu0 0
    %93 = vmatpush1.bf16.msra.mxu0 0
    %94 = vmatprep.subr.bf16.mxu0 0
    %95 = vmatpush1.bf16.msra.mxu0 0
    %96 = vmatprep.subr.bf16.mxu0 0
    %97 = vmatpush1.bf16.msra.mxu0 0
    %98 = vmatprep.subr.bf16.mxu0 0
    %99 = vmatpush1.bf16.msra.mxu0 0
    %100 = vmatprep.subr.bf16.mxu0 0
    %101 = vmatpush1.bf16.msra.mxu0 0
    %102 = vmatprep.subr.bf16.mxu0 0
    %103 = vmatpush1.bf16.msra.mxu0 0
    %104 = vmatprep.subr.bf16.mxu0 0
    %105 = vmatpush1.bf16.msra.mxu0 0
    %106 = vmatprep.subr.bf16.mxu0 0
    %107 = vmatpush1.bf16.msra.mxu0 0
    %108 = vmatprep.subr.bf16.mxu0 0
    %109 = vmatpush1.bf16.msra.mxu0 0
    %110 = vmatprep.subr.bf16.mxu0 0
    %111 = vmatpush1.bf16.msra.mxu0 0
    %112 = vmatprep.mubr.bf16.mxu0 0
    %113 = vmatmul.mubr.bf16.gmra.mrb[0].mxu0 %v78
    %v114 = vpop.f32.mrb[0].mxu0
    %v115 = vadd.f32 %v49, %v114
    %v116 = vpop.f32.mrb[0].mxu0
    %v117 = vadd.f32 %v53, %v116
    %v118 = vpop.f32.mrb[0].mxu0
    %v119 = vpop.f32.mrb[0].mxu0
    %120 = vdwg.mxu0
    %121 = vst [vmem:[#allocation2] sm:$0xff] %v115
    %122 = vst [vmem:[#allocation2 + $0x8] sm:$0xff] %v117
    %v123 = vld [vmem:[%s2] sm:$0xff]
    %v124 = vld [vmem:[%s2 + $0x8] sm:$0xff]
    %v125 = vld [vmem:[%s2 + $0x10] sm:$0xff]
    %v126 = vld [vmem:[%s2 + $0x18] sm:$0xff]
    %v127 = vld [vmem:[%s2 + $0x20] sm:$0xff]
    %v128 = vld [vmem:[%s2 + $0x28] sm:$0xff]
    %v129 = vld [vmem:[%s2 + $0x30] sm:$0xff]
    %v130 = vld [vmem:[%s2 + $0x38] sm:$0xff]
    %v131 = vld [vmem:[#allocation2] ss:$8 sm:$0x3]
    %v140 = vunpack.c.l.b16 %v123
    %v141 = vunpack.c.h.b16 %v123
    %v142 = vunpack.c.l.b16 %v124
    %v143 = vunpack.c.h.b16 %v124
    %v144 = vunpack.c.l.b16 %v125
    %v145 = vunpack.c.h.b16 %v125
    %v146 = vunpack.c.l.b16 %v126
    %v147 = vunpack.c.h.b16 %v126
    %v148 = vunpack.c.l.b16 %v127
    %v149 = vunpack.c.h.b16 %v127
    %v150 = vunpack.c.l.b16 %v128
    %v151 = vunpack.c.h.b16 %v128
    %v152 = vunpack.c.l.b16 %v129
    %v153 = vunpack.c.h.b16 %v129
    %v154 = vunpack.c.l.b16 %v130
    %v155 = vunpack.c.h.b16 %v130
    %v156 = vpack.c.b16 %v142, %v140
    %v157 = vpack.c.b16 %v143, %v141
    %v158 = vpack.c.b16 %v146, %v144
    %v159 = vpack.c.b16 %v147, %v145
    %v160 = vpack.c.b16 %v150, %v148
    %v161 = vpack.c.b16 %v151, %v149
    %v162 = vpack.c.b16 %v154, %v152
    %v163 = vpack.c.b16 %v155, %v153
    %vm172 = vcmask 523264
    %v174 = vsel %vm172, 0, 0
    %176 = vmatprep.subr.bf16.mxu0 %v157
    %177 = vmatpush1.bf16.msra.mxu0 %v156
    %178 = vmatprep.subr.bf16.mxu0 %v159
    %179 = vmatpush1.bf16.msra.mxu0 %v158
    %180 = vmatprep.subr.bf16.mxu0 %v161
    %181 = vmatpush1.bf16.msra.mxu0 %v160
    %182 = vmatprep.subr.bf16.mxu0 %v163
    %183 = vmatpush1.bf16.msra.mxu0 %v162
    %184 = vmatprep.subr.bf16.mxu0 0
    %185 = vmatpush1.bf16.msra.mxu0 0
    %186 = vmatprep.subr.bf16.mxu0 0
    %187 = vmatpush1.bf16.msra.mxu0 0
    %188 = vmatprep.subr.bf16.mxu0 0
    %189 = vmatpush1.bf16.msra.mxu0 0
    %190 = vmatprep.subr.bf16.mxu0 0
    %191 = vmatpush1.bf16.msra.mxu0 0
    %192 = vmatprep.subr.bf16.mxu0 0
    %193 = vmatpush1.bf16.msra.mxu0 0
    %194 = vmatprep.subr.bf16.mxu0 0
    %195 = vmatpush1.bf16.msra.mxu0 0
    %196 = vmatprep.subr.bf16.mxu0 0
    %197 = vmatpush1.bf16.msra.mxu0 0
    %198 = vmatprep.subr.bf16.mxu0 0
    %199 = vmatpush1.bf16.msra.mxu0 0
    %200 = vmatprep.subr.bf16.mxu0 0
    %201 = vmatpush1.bf16.msra.mxu0 0
    %202 = vmatprep.subr.bf16.mxu0 0
    %203 = vmatpush1.bf16.msra.mxu0 0
    %204 = vmatprep.subr.bf16.mxu0 0
    %205 = vmatpush1.bf16.msra.mxu0 0
    %206 = vmatprep.subr.bf16.mxu0 0
    %207 = vmatpush1.bf16.msra.mxu0 0
    %208 = vmatprep.mubr.bf16.mxu0 0
    %209 = vmatmul.mubr.bf16.gmra.mrb[0].mxu0 %v174
    %v210 = vpop.f32.mrb[0].mxu0
    %v211 = vadd.f32 0.0, %v210
    %v212 = vpop.f32.mrb[0].mxu0
    %v213 = vadd.f32 0.0, %v212
    %v214 = vpop.f32.mrb[0].mxu0
    %v215 = vpop.f32.mrb[0].mxu0
    %216 = vdwg.mxu0
    %v219 = vcombine.low %v211, %v213
    %v221 = vunpack.c.l.s4 1966171168
    %v222 = vunpack.c.0.s8 %v221
    %v223 = vlaneseq
    %v224 = vshrl.u32 %v223, 7
    %v225 = vsub.s32 %v222, %v224
    %v226 = vrot.slane %v219, %v225
    %v228 = vunpack.c.l.s4 1966171168
    %v229 = vunpack.c.0.s8 %v228
    %v230 = vlaneseq
    %v231 = vshrl.u32 %v230, 7
    %v232 = vsub.s32 %v229, %v231
    %v233 = vrot.slane %v226, %v232
    %v235 = vadd.f32 %v131, %v233
    %v236 = vxor.u32 %v235, 2147483648
    %v237 = vmul.f32 %v236, 1.442695
    %v238 = vpow.pop %v237
    %v239 = vadd.f32 %v238, 1.0
    %v240 = vrcp.pop %v239
    %v241 = vmul.f32 1.0, %v240
    %243 = vrot.lane.b32.xlu0 %v235, 64
    %v244 = vpop.permute.xlu0 %243
    %v245 = vrot.slane %v244, 1
    %v247 = vtanh.pop %v245
    %v248 = vmul.f32 %v241, 0.0
    %v249 = vmul.f32 %v241, %v247
    %251 = vrot.lane.b32.xlu0 %v249, 64
    %v252 = vpop.permute.xlu0 %251
    %v254 = vadd.f32 %v248, %v252
    %v255 = vtanh.pop %v254
    %v257 = vrot.slane %v241, 1
    %260 = vrot.lane.b32.xlu0 %v255, 64
    %v261 = vpop.permute.xlu0 %260
    %v263 = vmul.f32 %v257, %v261
    %vm264 = vcmask 253952
    %265 = vst.msk [vmem:[#allocation3] sm:$0x1] %vm264, %v263
    %vm266 = vcmask 516352
    %267 = vst.msk [vmem:[#allocation3 + $0x7] sm:$0x1] %vm266, %v263
    %s268 = scalar_lea.vmem [#allocation2], 1
    %v269 = vld [vmem:[%s268] ss:$8 sm:$0x3]
    %v270 = vpack.c.bf16 %v263, %v263
    %v272 = vsel %vm172, %v270, 0
    %274 = vmatprep.subr.bf16.mxu0 %v157
    %275 = vmatpush1.bf16.msra.mxu0 %v156
    %276 = vmatprep.subr.bf16.mxu0 %v159
    %277 = vmatpush1.bf16.msra.mxu0 %v158
    %278 = vmatprep.subr.bf16.mxu0 %v161
    %279 = vmatpush1.bf16.msra.mxu0 %v160
    %280 = vmatprep.subr.bf16.mxu0 %v163
    %281 = vmatpush1.bf16.msra.mxu0 %v162
    %282 = vmatprep.subr.bf16.mxu0 0
    %283 = vmatpush1.bf16.msra.mxu0 0
    %284 = vmatprep.subr.bf16.mxu0 0
    %285 = vmatpush1.bf16.msra.mxu0 0
    %286 = vmatprep.subr.bf16.mxu0 0
    %287 = vmatpush1.bf16.msra.mxu0 0
    %288 = vmatprep.subr.bf16.mxu0 0
    %289 = vmatpush1.bf16.msra.mxu0 0
    %290 = vmatprep.subr.bf16.mxu0 0
    %291 = vmatpush1.bf16.msra.mxu0 0
    %292 = vmatprep.subr.bf16.mxu0 0
    %293 = vmatpush1.bf16.msra.mxu0 0
    %294 = vmatprep.subr.bf16.mxu0 0
    %295 = vmatpush1.bf16.msra.mxu0 0
    %296 = vmatprep.subr.bf16.mxu0 0
    %297 = vmatpush1.bf16.msra.mxu0 0
    %298 = vmatprep.subr.bf16.mxu0 0
    %299 = vmatpush1.bf16.msra.mxu0 0
    %300 = vmatprep.subr.bf16.mxu0 0
    %301 = vmatpush1.bf16.msra.mxu0 0
    %302 = vmatprep.subr.bf16.mxu0 0
    %303 = vmatpush1.bf16.msra.mxu0 0
    %304 = vmatprep.subr.bf16.mxu0 0
    %305 = vmatpush1.bf16.msra.mxu0 0
    %306 = vmatprep.mubr.bf16.mxu0 0
    %307 = vmatmul.mubr.bf16.gmra.mrb[0].mxu0 %v272
    %v308 = vpop.f32.mrb[0].mxu0
    %v309 = vadd.f32 0.0, %v308
    %v310 = vpop.f32.mrb[0].mxu0
    %v311 = vadd.f32 0.0, %v310
    %v312 = vpop.f32.mrb[0].mxu0
    %v313 = vpop.f32.mrb[0].mxu0
    %314 = vdwg.mxu0
    %v317 = vcombine.low %v309, %v311
    %v319 = vunpack.c.l.s4 1966171168
    %v320 = vunpack.c.0.s8 %v319
    %v321 = vlaneseq
    %v322 = vshrl.u32 %v321, 7
    %v323 = vsub.s32 %v320, %v322
    %v324 = vrot.slane %v317, %v323
    %v326 = vunpack.c.l.s4 1966171168
    %v327 = vunpack.c.0.s8 %v326
    %v328 = vlaneseq
    %v329 = vshrl.u32 %v328, 7
    %v330 = vsub.s32 %v327, %v329
    %v331 = vrot.slane %v324, %v330
    %v333 = vadd.f32 %v269, %v331
    %v334 = vxor.u32 %v333, 2147483648
    %v335 = vmul.f32 %v334, 1.442695
    %v336 = vpow.pop %v335
    %v337 = vadd.f32 %v336, 1.0
    %v338 = vrcp.pop %v337
    %v339 = vmul.f32 1.0, %v338
    %341 = vrot.lane.b32.xlu0 %v333, 64
    %v342 = vpop.permute.xlu0 %341
    %v343 = vrot.slane %v342, 1
    %v345 = vtanh.pop %v343
    %v346 = vmul.f32 %v339, %v254
    %v347 = vmul.f32 %v339, %v345
    %349 = vrot.lane.b32.xlu0 %v347, 64
    %v350 = vpop.permute.xlu0 %349
    %v352 = vadd.f32 %v346, %v350
    %v353 = vtanh.pop %v352
    %v355 = vrot.slane %v339, 1
    %358 = vrot.lane.b32.xlu0 %v353, 64
    %v359 = vpop.permute.xlu0 %358
    %v361 = vmul.f32 %v355, %v359
    %362 = vst.msk [vmem:[#allocation3 + $0x1] sm:$0x1] %vm264, %v361
    %363 = vst.msk [vmem:[#allocation3 + $0x6] sm:$0x1] %vm266, %v361
    %s364 = scalar_lea.vmem [#allocation2], 2
    %v365 = vld [vmem:[%s364] ss:$8 sm:$0x3]
    %v366 = vpack.c.bf16 %v361, %v361
    %v368 = vsel %vm172, %v366, 0
    %370 = vmatprep.subr.bf16.mxu0 %v157
    %371 = vmatpush1.bf16.msra.mxu0 %v156
    %372 = vmatprep.subr.bf16.mxu0 %v159
    %373 = vmatpush1.bf16.msra.mxu0 %v158
    %374 = vmatprep.subr.bf16.mxu0 %v161
    %375 = vmatpush1.bf16.msra.mxu0 %v160
    %376 = vmatprep.subr.bf16.mxu0 %v163
    %377 = vmatpush1.bf16.msra.mxu0 %v162
    %378 = vmatprep.subr.bf16.mxu0 0
    %379 = vmatpush1.bf16.msra.mxu0 0
    %380 = vmatprep.subr.bf16.mxu0 0
    %381 = vmatpush1.bf16.msra.mxu0 0
    %382 = vmatprep.subr.bf16.mxu0 0
    %383 = vmatpush1.bf16.msra.mxu0 0
    %384 = vmatprep.subr.bf16.mxu0 0
    %385 = vmatpush1.bf16.msra.mxu0 0
    %386 = vmatprep.subr.bf16.mxu0 0
    %387 = vmatpush1.bf16.msra.mxu0 0
    %388 = vmatprep.subr.bf16.mxu0 0
    %389 = vmatpush1.bf16.msra.mxu0 0
    %390 = vmatprep.subr.bf16.mxu0 0
    %391 = vmatpush1.bf16.msra.mxu0 0
    %392 = vmatprep.subr.bf16.mxu0 0
    %393 = vmatpush1.bf16.msra.mxu0 0
    %394 = vmatprep.subr.bf16.mxu0 0
    %395 = vmatpush1.bf16.msra.mxu0 0
    %396 = vmatprep.subr.bf16.mxu0 0
    %397 = vmatpush1.bf16.msra.mxu0 0
    %398 = vmatprep.subr.bf16.mxu0 0
    %399 = vmatpush1.bf16.msra.mxu0 0
    %400 = vmatprep.subr.bf16.mxu0 0
    %401 = vmatpush1.bf16.msra.mxu0 0
    %402 = vmatprep.mubr.bf16.mxu0 0
    %403 = vmatmul.mubr.bf16.gmra.mrb[0].mxu0 %v368
    %v404 = vpop.f32.mrb[0].mxu0
    %v405 = vadd.f32 0.0, %v404
    %v406 = vpop.f32.mrb[0].mxu0
    %v407 = vadd.f32 0.0, %v406
    %v408 = vpop.f32.mrb[0].mxu0
    %v409 = vpop.f32.mrb[0].mxu0
    %410 = vdwg.mxu0
    %v413 = vcombine.low %v405, %v407
    %v415 = vunpack.c.l.s4 1966171168
    %v416 = vunpack.c.0.s8 %v415
    %v417 = vlaneseq
    %v418 = vshrl.u32 %v417, 7
    %v419 = vsub.s32 %v416, %v418
    %v420 = vrot.slane %v413, %v419
    %v422 = vunpack.c.l.s4 1966171168
    %v423 = vunpack.c.0.s8 %v422
    %v424 = vlaneseq
    %v425 = vshrl.u32 %v424, 7
    %v426 = vsub.s32 %v423, %v425
    %v427 = vrot.slane %v420, %v426
    %v429 = vadd.f32 %v365, %v427
    %v430 = vxor.u32 %v429, 2147483648
    %v431 = vmul.f32 %v430, 1.442695
    %v432 = vpow.pop %v431
    %v433 = vadd.f32 %v432, 1.0
    %v434 = vrcp.pop %v433
    %v435 = vmul.f32 1.0, %v434
    %437 = vrot.lane.b32.xlu0 %v429, 64
    %v438 = vpop.permute.xlu0 %437
    %v439 = vrot.slane %v438, 1
    %v441 = vtanh.pop %v439
    %v442 = vmul.f32 %v435, %v352
    %v443 = vmul.f32 %v435, %v441
    %445 = vrot.lane.b32.xlu0 %v443, 64
    %v446 = vpop.permute.xlu0 %445
    %v448 = vadd.f32 %v442, %v446
    %v449 = vtanh.pop %v448
    %v451 = vrot.slane %v435, 1
    %454 = vrot.lane.b32.xlu0 %v449, 64
    %v455 = vpop.permute.xlu0 %454
    %v457 = vmul.f32 %v451, %v455
    %458 = vst.msk [vmem:[#allocation3 + $0x2] sm:$0x1] %vm264, %v457
    %459 = vst.msk [vmem:[#allocation3 + $0x5] sm:$0x1] %vm266, %v457
    %s460 = scalar_lea.vmem [#allocation2], 3
    %v461 = vld [vmem:[%s460] ss:$8 sm:$0x3]
    %v462 = vpack.c.bf16 %v457, %v457
    %v464 = vsel %vm172, %v462, 0
    %466 = vmatprep.subr.bf16.mxu0 %v157
    %467 = vmatpush1.bf16.msra.mxu0 %v156
    %468 = vmatprep.subr.bf16.mxu0 %v159
    %469 = vmatpush1.bf16.msra.mxu0 %v158
    %470 = vmatprep.subr.bf16.mxu0 %v161
    %471 = vmatpush1.bf16.msra.mxu0 %v160
    %472 = vmatprep.subr.bf16.mxu0 %v163
    %473 = vmatpush1.bf16.msra.mxu0 %v162
    %474 = vmatprep.subr.bf16.mxu0 0
    %475 = vmatpush1.bf16.msra.mxu0 0
    %476 = vmatprep.subr.bf16.mxu0 0
    %477 = vmatpush1.bf16.msra.mxu0 0
    %478 = vmatprep.subr.bf16.mxu0 0
    %479 = vmatpush1.bf16.msra.mxu0 0
    %480 = vmatprep.subr.bf16.mxu0 0
    %481 = vmatpush1.bf16.msra.mxu0 0
    %482 = vmatprep.subr.bf16.mxu0 0
    %483 = vmatpush1.bf16.msra.mxu0 0
    %484 = vmatprep.subr.bf16.mxu0 0
    %485 = vmatpush1.bf16.msra.mxu0 0
    %486 = vmatprep.subr.bf16.mxu0 0
    %487 = vmatpush1.bf16.msra.mxu0 0
    %488 = vmatprep.subr.bf16.mxu0 0
    %489 = vmatpush1.bf16.msra.mxu0 0
    %490 = vmatprep.subr.bf16.mxu0 0
    %491 = vmatpush1.bf16.msra.mxu0 0
    %492 = vmatprep.subr.bf16.mxu0 0
    %493 = vmatpush1.bf16.msra.mxu0 0
    %494 = vmatprep.subr.bf16.mxu0 0
    %495 = vmatpush1.bf16.msra.mxu0 0
    %496 = vmatprep.subr.bf16.mxu0 0
    %497 = vmatpush1.bf16.msra.mxu0 0
    %498 = vmatprep.mubr.bf16.mxu0 0
    %499 = vmatmul.mubr.bf16.gmra.mrb[0].mxu0 %v464
    %v500 = vpop.f32.mrb[0].mxu0
    %v501 = vadd.f32 0.0, %v500
    %v502 = vpop.f32.mrb[0].mxu0
    %v503 = vadd.f32 0.0, %v502
    %v504 = vpop.f32.mrb[0].mxu0
    %v505 = vpop.f32.mrb[0].mxu0
    %506 = vdwg.mxu0
    %v509 = vcombine.low %v501, %v503
    %v511 = vunpack.c.l.s4 1966171168
    %v512 = vunpack.c.0.s8 %v511
    %v513 = vlaneseq
    %v514 = vshrl.u32 %v513, 7
    %v515 = vsub.s32 %v512, %v514
    %v516 = vrot.slane %v509, %v515
    %v518 = vunpack.c.l.s4 1966171168
    %v519 = vunpack.c.0.s8 %v518
    %v520 = vlaneseq
    %v521 = vshrl.u32 %v520, 7
    %v522 = vsub.s32 %v519, %v521
    %v523 = vrot.slane %v516, %v522
    %v525 = vadd.f32 %v461, %v523
    %v526 = vxor.u32 %v525, 2147483648
    %v527 = vmul.f32 %v526, 1.442695
    %v528 = vpow.pop %v527
    %v529 = vadd.f32 %v528, 1.0
    %v530 = vrcp.pop %v529
    %v531 = vmul.f32 1.0, %v530
    %533 = vrot.lane.b32.xlu0 %v525, 64
    %v534 = vpop.permute.xlu0 %533
    %v535 = vrot.slane %v534, 1
    %v537 = vtanh.pop %v535
    %v538 = vmul.f32 %v531, %v448
    %v539 = vmul.f32 %v531, %v537
    %541 = vrot.lane.b32.xlu0 %v539, 64
    %v542 = vpop.permute.xlu0 %541
    %v544 = vadd.f32 %v538, %v542
    %v545 = vtanh.pop %v544
    %v547 = vrot.slane %v531, 1
    %550 = vrot.lane.b32.xlu0 %v545, 64
    %v551 = vpop.permute.xlu0 %550
    %v553 = vmul.f32 %v547, %v551
    %554 = vst.msk [vmem:[#allocation3 + $0x3] sm:$0x1] %vm264, %v553
    %555 = vst.msk [vmem:[#allocation3 + $0x4] sm:$0x1] %vm266, %v553
    %s556 = scalar_lea.vmem [#allocation2], 4
    %v557 = vld [vmem:[%s556] ss:$8 sm:$0x3]
    %v558 = vpack.c.bf16 %v553, %v553
    %v560 = vsel %vm172, %v558, 0
    %562 = vmatprep.subr.bf16.mxu0 %v157
    %563 = vmatpush1.bf16.msra.mxu0 %v156
    %564 = vmatprep.subr.bf16.mxu0 %v159
    %565 = vmatpush1.bf16.msra.mxu0 %v158
    %566 = vmatprep.subr.bf16.mxu0 %v161
    %567 = vmatpush1.bf16.msra.mxu0 %v160
    %568 = vmatprep.subr.bf16.mxu0 %v163
    %569 = vmatpush1.bf16.msra.mxu0 %v162
    %570 = vmatprep.subr.bf16.mxu0 0
    %571 = vmatpush1.bf16.msra.mxu0 0
    %572 = vmatprep.subr.bf16.mxu0 0
    %573 = vmatpush1.bf16.msra.mxu0 0
    %574 = vmatprep.subr.bf16.mxu0 0
    %575 = vmatpush1.bf16.msra.mxu0 0
    %576 = vmatprep.subr.bf16.mxu0 0
    %577 = vmatpush1.bf16.msra.mxu0 0
    %578 = vmatprep.subr.bf16.mxu0 0
    %579 = vmatpush1.bf16.msra.mxu0 0
    %580 = vmatprep.subr.bf16.mxu0 0
    %581 = vmatpush1.bf16.msra.mxu0 0
    %582 = vmatprep.subr.bf16.mxu0 0
    %583 = vmatpush1.bf16.msra.mxu0 0
    %584 = vmatprep.subr.bf16.mxu0 0
    %585 = vmatpush1.bf16.msra.mxu0 0
    %586 = vmatprep.subr.bf16.mxu0 0
    %587 = vmatpush1.bf16.msra.mxu0 0
    %588 = vmatprep.subr.bf16.mxu0 0
    %589 = vmatpush1.bf16.msra.mxu0 0
    %590 = vmatprep.subr.bf16.mxu0 0
    %591 = vmatpush1.bf16.msra.mxu0 0
    %592 = vmatprep.subr.bf16.mxu0 0
    %593 = vmatpush1.bf16.msra.mxu0 0
    %594 = vmatprep.mubr.bf16.mxu0 0
    %595 = vmatmul.mubr.bf16.gmra.mrb[0].mxu0 %v560
    %v596 = vpop.f32.mrb[0].mxu0
    %v597 = vadd.f32 0.0, %v596
    %v598 = vpop.f32.mrb[0].mxu0
    %v599 = vadd.f32 0.0, %v598
    %v600 = vpop.f32.mrb[0].mxu0
    %v601 = vpop.f32.mrb[0].mxu0
    %602 = vdwg.mxu0
    %v605 = vcombine.low %v597, %v599
    %v607 = vunpack.c.l.s4 1966171168
    %v608 = vunpack.c.0.s8 %v607
    %v609 = vlaneseq
    %v610 = vshrl.u32 %v609, 7
    %v611 = vsub.s32 %v608, %v610
    %v612 = vrot.slane %v605, %v611
    %v614 = vunpack.c.l.s4 1966171168
    %v615 = vunpack.c.0.s8 %v614
    %v616 = vlaneseq
    %v617 = vshrl.u32 %v616, 7
    %v618 = vsub.s32 %v615, %v617
    %v619 = vrot.slane %v612, %v618
    %v621 = vadd.f32 %v557, %v619
    %v622 = vxor.u32 %v621, 2147483648
    %v623 = vmul.f32 %v622, 1.442695
    %v624 = vpow.pop %v623
    %v625 = vadd.f32 %v624, 1.0
    %v626 = vrcp.pop %v625
    %v627 = vmul.f32 1.0, %v626
    %629 = vrot.lane.b32.xlu0 %v621, 64
    %v630 = vpop.permute.xlu0 %629
    %v631 = vrot.slane %v630, 1
    %v633 = vtanh.pop %v631
    %v634 = vmul.f32 %v627, %v544
    %v635 = vmul.f32 %v627, %v633
    %637 = vrot.lane.b32.xlu0 %v635, 64
    %v638 = vpop.permute.xlu0 %637
    %v640 = vadd.f32 %v634, %v638
    %v641 = vtanh.pop %v640
    %v643 = vrot.slane %v627, 1
    %646 = vrot.lane.b32.xlu0 %v641, 64
    %v647 = vpop.permute.xlu0 %646
    %v649 = vmul.f32 %v643, %v647
    %650 = vst.msk [vmem:[#allocation3 + $0x4] sm:$0x1] %vm264, %v649
    %651 = vst.msk [vmem:[#allocation3 + $0x3] sm:$0x1] %vm266, %v649
    %s652 = scalar_lea.vmem [#allocation2], 5
    %v653 = vld [vmem:[%s652] ss:$8 sm:$0x3]
    %v654 = vpack.c.bf16 %v649, %v649
    %v656 = vsel %vm172, %v654, 0
    %658 = vmatprep.subr.bf16.mxu0 %v157
    %659 = vmatpush1.bf16.msra.mxu0 %v156
    %660 = vmatprep.subr.bf16.mxu0 %v159
    %661 = vmatpush1.bf16.msra.mxu0 %v158
    %662 = vmatprep.subr.bf16.mxu0 %v161
    %663 = vmatpush1.bf16.msra.mxu0 %v160
    %664 = vmatprep.subr.bf16.mxu0 %v163
    %665 = vmatpush1.bf16.msra.mxu0 %v162
    %666 = vmatprep.subr.bf16.mxu0 0
    %667 = vmatpush1.bf16.msra.mxu0 0
    %668 = vmatprep.subr.bf16.mxu0 0
    %669 = vmatpush1.bf16.msra.mxu0 0
    %670 = vmatprep.subr.bf16.mxu0 0
    %671 = vmatpush1.bf16.msra.mxu0 0
    %672 = vmatprep.subr.bf16.mxu0 0
    %673 = vmatpush1.bf16.msra.mxu0 0
    %674 = vmatprep.subr.bf16.mxu0 0
    %675 = vmatpush1.bf16.msra.mxu0 0
    %676 = vmatprep.subr.bf16.mxu0 0
    %677 = vmatpush1.bf16.msra.mxu0 0
    %678 = vmatprep.subr.bf16.mxu0 0
    %679 = vmatpush1.bf16.msra.mxu0 0
    %680 = vmatprep.subr.bf16.mxu0 0
    %681 = vmatpush1.bf16.msra.mxu0 0
    %682 = vmatprep.subr.bf16.mxu0 0
    %683 = vmatpush1.bf16.msra.mxu0 0
    %684 = vmatprep.subr.bf16.mxu0 0
    %685 = vmatpush1.bf16.msra.mxu0 0
    %686 = vmatprep.subr.bf16.mxu0 0
    %687 = vmatpush1.bf16.msra.mxu0 0
    %688 = vmatprep.subr.bf16.mxu0 0
    %689 = vmatpush1.bf16.msra.mxu0 0
    %690 = vmatprep.mubr.bf16.mxu0 0
    %691 = vmatmul.mubr.bf16.gmra.mrb[0].mxu0 %v656
    %v692 = vpop.f32.mrb[0].mxu0
    %v693 = vadd.f32 0.0, %v692
    %v694 = vpop.f32.mrb[0].mxu0
    %v695 = vadd.f32 0.0, %v694
    %v696 = vpop.f32.mrb[0].mxu0
    %v697 = vpop.f32.mrb[0].mxu0
    %698 = vdwg.mxu0
    %v701 = vcombine.low %v693, %v695
    %v703 = vunpack.c.l.s4 1966171168
    %v704 = vunpack.c.0.s8 %v703
    %v705 = vlaneseq
    %v706 = vshrl.u32 %v705, 7
    %v707 = vsub.s32 %v704, %v706
    %v708 = vrot.slane %v701, %v707
    %v710 = vunpack.c.l.s4 1966171168
    %v711 = vunpack.c.0.s8 %v710
    %v712 = vlaneseq
    %v713 = vshrl.u32 %v712, 7
    %v714 = vsub.s32 %v711, %v713
    %v715 = vrot.slane %v708, %v714
    %v717 = vadd.f32 %v653, %v715
    %v718 = vxor.u32 %v717, 2147483648
    %v719 = vmul.f32 %v718, 1.442695
    %v720 = vpow.pop %v719
    %v721 = vadd.f32 %v720, 1.0
    %v722 = vrcp.pop %v721
    %v723 = vmul.f32 1.0, %v722
    %725 = vrot.lane.b32.xlu0 %v717, 64
    %v726 = vpop.permute.xlu0 %725
    %v727 = vrot.slane %v726, 1
    %v729 = vtanh.pop %v727
    %v730 = vmul.f32 %v723, %v640
    %v731 = vmul.f32 %v723, %v729
    %733 = vrot.lane.b32.xlu0 %v731, 64
    %v734 = vpop.permute.xlu0 %733
    %v736 = vadd.f32 %v730, %v734
    %v737 = vtanh.pop %v736
    %v739 = vrot.slane %v723, 1
    %742 = vrot.lane.b32.xlu0 %v737, 64
    %v743 = vpop.permute.xlu0 %742
    %v745 = vmul.f32 %v739, %v743
    %746 = vst.msk [vmem:[#allocation3 + $0x5] sm:$0x1] %vm264, %v745
    %747 = vst.msk [vmem:[#allocation3 + $0x2] sm:$0x1] %vm266, %v745
    %s748 = scalar_lea.vmem [#allocation2], 6
    %v749 = vld [vmem:[%s748] ss:$8 sm:$0x3]
    %v750 = vpack.c.bf16 %v745, %v745
    %v752 = vsel %vm172, %v750, 0
    %754 = vmatprep.subr.bf16.mxu0 %v157
    %755 = vmatpush1.bf16.msra.mxu0 %v156
    %756 = vmatprep.subr.bf16.mxu0 %v159
    %757 = vmatpush1.bf16.msra.mxu0 %v158
    %758 = vmatprep.subr.bf16.mxu0 %v161
    %759 = vmatpush1.bf16.msra.mxu0 %v160
    %760 = vmatprep.subr.bf16.mxu0 %v163
    %761 = vmatpush1.bf16.msra.mxu0 %v162
    %762 = vmatprep.subr.bf16.mxu0 0
    %763 = vmatpush1.bf16.msra.mxu0 0
    %764 = vmatprep.subr.bf16.mxu0 0
    %765 = vmatpush1.bf16.msra.mxu0 0
    %766 = vmatprep.subr.bf16.mxu0 0
    %767 = vmatpush1.bf16.msra.mxu0 0
    %768 = vmatprep.subr.bf16.mxu0 0
    %769 = vmatpush1.bf16.msra.mxu0 0
    %770 = vmatprep.subr.bf16.mxu0 0
    %771 = vmatpush1.bf16.msra.mxu0 0
    %772 = vmatprep.subr.bf16.mxu0 0
    %773 = vmatpush1.bf16.msra.mxu0 0
    %774 = vmatprep.subr.bf16.mxu0 0
    %775 = vmatpush1.bf16.msra.mxu0 0
    %776 = vmatprep.subr.bf16.mxu0 0
    %777 = vmatpush1.bf16.msra.mxu0 0
    %778 = vmatprep.subr.bf16.mxu0 0
    %779 = vmatpush1.bf16.msra.mxu0 0
    %780 = vmatprep.subr.bf16.mxu0 0
    %781 = vmatpush1.bf16.msra.mxu0 0
    %782 = vmatprep.subr.bf16.mxu0 0
    %783 = vmatpush1.bf16.msra.mxu0 0
    %784 = vmatprep.subr.bf16.mxu0 0
    %785 = vmatpush1.bf16.msra.mxu0 0
    %786 = vmatprep.mubr.bf16.mxu0 0
    %787 = vmatmul.mubr.bf16.gmra.mrb[0].mxu0 %v752
    %v788 = vpop.f32.mrb[0].mxu0
    %v789 = vadd.f32 0.0, %v788
    %v790 = vpop.f32.mrb[0].mxu0
    %v791 = vadd.f32 0.0, %v790
    %v792 = vpop.f32.mrb[0].mxu0
    %v793 = vpop.f32.mrb[0].mxu0
    %794 = vdwg.mxu0
    %v797 = vcombine.low %v789, %v791
    %v799 = vunpack.c.l.s4 1966171168
    %v800 = vunpack.c.0.s8 %v799
    %v801 = vlaneseq
    %v802 = vshrl.u32 %v801, 7
    %v803 = vsub.s32 %v800, %v802
    %v804 = vrot.slane %v797, %v803
    %v806 = vunpack.c.l.s4 1966171168
    %v807 = vunpack.c.0.s8 %v806
    %v808 = vlaneseq
    %v809 = vshrl.u32 %v808, 7
    %v810 = vsub.s32 %v807, %v809
    %v811 = vrot.slane %v804, %v810
    %v813 = vadd.f32 %v749, %v811
    %v814 = vxor.u32 %v813, 2147483648
    %v815 = vmul.f32 %v814, 1.442695
    %v816 = vpow.pop %v815
    %v817 = vadd.f32 %v816, 1.0
    %v818 = vrcp.pop %v817
    %v819 = vmul.f32 1.0, %v818
    %821 = vrot.lane.b32.xlu0 %v813, 64
    %v822 = vpop.permute.xlu0 %821
    %v823 = vrot.slane %v822, 1
    %v825 = vtanh.pop %v823
    %v826 = vmul.f32 %v819, %v736
    %v827 = vmul.f32 %v819, %v825
    %829 = vrot.lane.b32.xlu0 %v827, 64
    %v830 = vpop.permute.xlu0 %829
    %v832 = vadd.f32 %v826, %v830
    %v833 = vtanh.pop %v832
    %v835 = vrot.slane %v819, 1
    %838 = vrot.lane.b32.xlu0 %v833, 64
    %v839 = vpop.permute.xlu0 %838
    %v841 = vmul.f32 %v835, %v839
    %842 = vst.msk [vmem:[#allocation3 + $0x6] sm:$0x1] %vm264, %v841
    %843 = vst.msk [vmem:[#allocation3 + $0x1] sm:$0x1] %vm266, %v841
    %s844 = scalar_lea.vmem [#allocation2], 7
    %v845 = vld [vmem:[%s844] ss:$8 sm:$0x3]
    %v846 = vpack.c.bf16 %v841, %v841
    %v848 = vsel %vm172, %v846, 0
    %850 = vmatprep.subr.bf16.mxu0 %v157
    %851 = vmatpush1.bf16.msra.mxu0 %v156
    %852 = vmatprep.subr.bf16.mxu0 %v159
    %853 = vmatpush1.bf16.msra.mxu0 %v158
    %854 = vmatprep.subr.bf16.mxu0 %v161
    %855 = vmatpush1.bf16.msra.mxu0 %v160
    %856 = vmatprep.subr.bf16.mxu0 %v163
    %857 = vmatpush1.bf16.msra.mxu0 %v162
    %858 = vmatprep.subr.bf16.mxu0 0
    %859 = vmatpush1.bf16.msra.mxu0 0
    %860 = vmatprep.subr.bf16.mxu0 0
    %861 = vmatpush1.bf16.msra.mxu0 0
    %862 = vmatprep.subr.bf16.mxu0 0
    %863 = vmatpush1.bf16.msra.mxu0 0
    %864 = vmatprep.subr.bf16.mxu0 0
    %865 = vmatpush1.bf16.msra.mxu0 0
    %866 = vmatprep.subr.bf16.mxu0 0
    %867 = vmatpush1.bf16.msra.mxu0 0
    %868 = vmatprep.subr.bf16.mxu0 0
    %869 = vmatpush1.bf16.msra.mxu0 0
    %870 = vmatprep.subr.bf16.mxu0 0
    %871 = vmatpush1.bf16.msra.mxu0 0
    %872 = vmatprep.subr.bf16.mxu0 0
    %873 = vmatpush1.bf16.msra.mxu0 0
    %874 = vmatprep.subr.bf16.mxu0 0
    %875 = vmatpush1.bf16.msra.mxu0 0
    %876 = vmatprep.subr.bf16.mxu0 0
    %877 = vmatpush1.bf16.msra.mxu0 0
    %878 = vmatprep.subr.bf16.mxu0 0
    %879 = vmatpush1.bf16.msra.mxu0 0
    %880 = vmatprep.subr.bf16.mxu0 0
    %881 = vmatpush1.bf16.msra.mxu0 0
    %882 = vmatprep.mubr.bf16.mxu0 0
    %883 = vmatmul.mubr.bf16.gmra.mrb[0].mxu0 %v848
    %v884 = vpop.f32.mrb[0].mxu0
    %v885 = vadd.f32 0.0, %v884
    %v886 = vpop.f32.mrb[0].mxu0
    %v887 = vadd.f32 0.0, %v886
    %v888 = vpop.f32.mrb[0].mxu0
    %v889 = vpop.f32.mrb[0].mxu0
    %890 = vdwg.mxu0
    %v893 = vcombine.low %v885, %v887
    %v895 = vunpack.c.l.s4 1966171168
    %v896 = vunpack.c.0.s8 %v895
    %v897 = vlaneseq
    %v898 = vshrl.u32 %v897, 7
    %v899 = vsub.s32 %v896, %v898
    %v900 = vrot.slane %v893, %v899
    %v902 = vunpack.c.l.s4 1966171168
    %v903 = vunpack.c.0.s8 %v902
    %v904 = vlaneseq
    %v905 = vshrl.u32 %v904, 7
    %v906 = vsub.s32 %v903, %v905
    %v907 = vrot.slane %v900, %v906
    %v909 = vadd.f32 %v845, %v907
    %v910 = vxor.u32 %v909, 2147483648
    %v911 = vmul.f32 %v910, 1.442695
    %v912 = vpow.pop %v911
    %v913 = vadd.f32 %v912, 1.0
    %v914 = vrcp.pop %v913
    %v915 = vmul.f32 1.0, %v914
    %917 = vrot.lane.b32.xlu0 %v909, 64
    %v918 = vpop.permute.xlu0 %917
    %v919 = vrot.slane %v918, 1
    %v921 = vtanh.pop %v919
    %v922 = vmul.f32 %v915, %v832
    %v923 = vmul.f32 %v915, %v921
    %925 = vrot.lane.b32.xlu0 %v923, 64
    %v926 = vpop.permute.xlu0 %925
    %v928 = vadd.f32 %v922, %v926
    %v929 = vtanh.pop %v928
    %v931 = vrot.slane %v915, 1
    %934 = vrot.lane.b32.xlu0 %v929, 64
    %v935 = vpop.permute.xlu0 %934
    %v937 = vmul.f32 %v931, %v935
    %938 = vst.msk [vmem:[#allocation3 + $0x7] sm:$0x1] %vm264, %v937
    %939 = vst.msk [vmem:[#allocation3] sm:$0x1] %vm266, %v937
    %v940 = vld [vmem:[#allocation3] sm:$0xff]
    %v941 = vld [vmem:[#allocation4] sm:$0xff]
    %v942 = vld [vmem:[#allocation4 + $0x8] sm:$0xff]
    %v943 = vld [vmem:[#allocation4 + $0x10] sm:$0xff]
    %v944 = vld [vmem:[#allocation4 + $0x18] sm:$0xff]
    %v945 = vld [vmem:[#allocation4 + $0x20] sm:$0xff]
    %v946 = vld [vmem:[#allocation4 + $0x28] sm:$0xff]
    %v947 = vld [vmem:[#allocation4 + $0x30] sm:$0xff]
    %v948 = vld [vmem:[#allocation4 + $0x38] sm:$0xff]
    %v949 = vld [vmem:[%s5] sm:$0x1]
    %v951 = vlaneseq
    %v952 = vshrl.u32 %v951, 7
    %v953 = vsub.s32 0, %v952
    %v954 = vrot.slane %v949, %v953
    %v957 = vsel %vm172, %v940, 0
    %959 = vmatprep.subr.mxu0 0.0
    %960 = vmatpush1.msra.mxu0 %v941
    %961 = vmatprep.subr.mxu0 0.0
    %962 = vmatpush1.msra.mxu0 %v942
    %963 = vmatprep.subr.mxu0 0.0
    %964 = vmatpush1.msra.mxu0 %v943
    %965 = vmatprep.subr.mxu0 0.0
    %966 = vmatpush1.msra.mxu0 %v944
    %967 = vmatprep.subr.mxu0 0.0
    %968 = vmatpush1.msra.mxu0 %v945
    %969 = vmatprep.subr.mxu0 0.0
    %970 = vmatpush1.msra.mxu0 %v946
    %971 = vmatprep.subr.mxu0 0.0
    %972 = vmatpush1.msra.mxu0 %v947
    %973 = vmatprep.subr.mxu0 0.0
    %974 = vmatpush1.msra.mxu0 %v948
    %975 = vmatprep.subr.mxu0 0.0
    %976 = vmatpush1.msra.mxu0 0.0
    %977 = vmatprep.subr.mxu0 0.0
    %978 = vmatpush1.msra.mxu0 0.0
    %979 = vmatprep.subr.mxu0 0.0
    %980 = vmatpush1.msra.mxu0 0.0
    %981 = vmatprep.subr.mxu0 0.0
    %982 = vmatpush1.msra.mxu0 0.0
    %983 = vmatprep.subr.mxu0 0.0
    %984 = vmatpush1.msra.mxu0 0.0
    %985 = vmatprep.subr.mxu0 0.0
    %986 = vmatpush1.msra.mxu0 0.0
    %987 = vmatprep.subr.mxu0 0.0
    %988 = vmatpush1.msra.mxu0 0.0
    %989 = vmatprep.subr.mxu0 0.0
    %990 = vmatpush1.msra.mxu0 0.0
    %991 = vmatprep.subr.mxu0 0.0
    %992 = vmatpush1.msra.mxu0 0.0
    %993 = vmatprep.subr.mxu0 0.0
    %994 = vmatpush1.msra.mxu0 0.0
    %995 = vmatprep.subr.mxu0 0.0
    %996 = vmatpush1.msra.mxu0 0.0
    %997 = vmatprep.subr.mxu0 0.0
    %998 = vmatpush1.msra.mxu0 0.0
    %999 = vmatprep.subr.mxu0 0.0
    %1000 = vmatpush1.msra.mxu0 0.0
    %1001 = vmatprep.subr.mxu0 0.0
    %1002 = vmatpush1.msra.mxu0 0.0
    %1003 = vmatprep.subr.mxu0 0.0
    %1004 = vmatpush1.msra.mxu0 0.0
    %1005 = vmatprep.subr.mxu0 0.0
    %1006 = vmatpush1.msra.mxu0 0.0
    %1007 = vmatprep.subr.mxu0 0.0
    %1008 = vmatpush1.msra.mxu0 0.0
    %1009 = vmatprep.subr.mxu0 0.0
    %1010 = vmatpush1.msra.mxu0 0.0
    %1011 = vmatprep.subr.mxu0 0.0
    %1012 = vmatpush1.msra.mxu0 0.0
    %1013 = vmatprep.subr.mxu0 0.0
    %1014 = vmatpush1.msra.mxu0 0.0
    %1015 = vmatprep.subr.mxu0 0.0
    %1016 = vmatpush1.msra.mxu0 0.0
    %1017 = vmatprep.subr.mxu0 0.0
    %1018 = vmatpush1.msra.mxu0 0.0
    %1019 = vmatprep.subr.mxu0 0.0
    %1020 = vmatpush1.msra.mxu0 0.0
    %1021 = vmatprep.subr.mxu0 0.0
    %1022 = vmatpush1.msra.mxu0 0.0
    %1023 = vmatprep.mubr.f32.mxu0 0.0
    %1024 = vmatmul.mubr.f32.gmra.mrb[0].mxu0 %v957
    %v1025 = vpop.f32.mrb[0].mxu0
    %v1026 = vadd.f32 %v954, %v1025
    %v1027 = vpop.f32.mrb[0].mxu0
    %1028 = vdwg.mxu0
    %1029 = vmax.xlane.f32.xlu0 %v1026
    %v1030 = vpop.xlane.xlu0 %1029
    %v1031 = vsub.f32 %v1026, %v1030
    %v1032 = vmul.f32 %v1031, 1.442695
    %v1033 = vpow.pop %v1032
    %1034 = vadd.xlane.f32.xlu0 %v1033
    %v1035 = vpop.xlane.xlu0 %1034
    %v1036 = vlog2.pop %v1035
    %v1037 = vmul.f32 %v1036, 0.6931472
    %v1038 = vadd.f32 %v1030, %v1037
    %v1039 = vsub.f32 %v1026, %v1038
    %1040 = vst [vmem:[#allocation7] sm:$0xff] %v1039
    // Predicated region
    $region30: #{_forward_padded.1} parent=1 // pred_check
      _
    $region31: #{_forward_padded.1} parent=1 // pred_check_branch
      %1042 = sbr.rel (0) target = $region33
    $region32: #{_forward_padded.1} parent=1 // pred_region
      %s1044 = ssub.s32 128, 128
      %1045 = vsyncadd [#allocation6], %s1044
      %s1047 = sshll.u32 [#allocation7], 4
      %s1048 = int_to_ptr.vmem [resolvable:$true] %s1047
      %1050 = dma.vmem_to_hbm [thread:$0]  %s1048, 128, %s6, [#allocation6]
    $region33: #{_forward_padded.1} parent=1 // pred_fallthru
      _
    // Predicated region
    $region34: #{_forward_padded.1} parent=1 // pred_check
      _
    $region35: #{_forward_padded.1} parent=1 // pred_check_branch
      %1052 = sbr.rel (0) target = $region37
    $region36: #{_forward_padded.1} parent=1 // pred_region
      %1053 = dma.done [#allocation6], 128
    $region37: #{_forward_padded.1} parent=1 // pred_fallthru
      _
    %1054 = vsyncpa [#allocation5], 1
    %1055 = vsyncpa [#allocation6], 1

</llo_original>
